<compile_context>
chip_gen: v5e
topology: v5e:2x2
jax: 0.10.0
libtpu: 0.0.40
codegen_flags: <defaults>
</compile_context>

<pallas_src>
import functools

import jax
import jax.numpy as jnp
from jax.experimental import pallas as pl
from jax.experimental.pallas import tpu as pltpu


def sam_kernel(x_ref, w_ref, b_ref, out_ref, pmax_ref, pavg_ref, *, ksize):
    """x_ref: (B,C,H,W) VMEM. w_ref: (2*K*K,) SMEM (order [in_c, ky, kx]).
    b_ref: (1,) SMEM. pmax_ref/pavg_ref: (B, H+2P, W+2P) VMEM scratch."""
    B, C, H, W = x_ref.shape
    P = ksize // 2

    x = x_ref[...]                                   # (B, C, H, W) f32

    # Channel-wise max / mean, unrolled over C (tiny, pure VPU).
    max_map = x[:, 0]
    sum_map = x[:, 0]
    for c in range(1, C):
        max_map = jnp.maximum(max_map, x[:, c])
        sum_map = sum_map + x[:, c]
    avg_map = sum_map * (1.0 / C)                    # (B, H, W)

    # Zero-pad both attention maps into scratch so conv windows are static slices.
    pmax_ref[...] = jnp.zeros(pmax_ref.shape, pmax_ref.dtype)
    pavg_ref[...] = jnp.zeros(pavg_ref.shape, pavg_ref.dtype)
    pmax_ref[:, pl.ds(P, H), pl.ds(P, W)] = max_map
    pavg_ref[:, pl.ds(P, H), pl.ds(P, W)] = avg_map

    # 7x7, 2-in-channel, 1-out-channel cross-correlation, fully unrolled
    # as scalar-broadcast FMAs (98 taps).  Channel 0 = max, channel 1 = avg,
    # matching torch.cat((max, avg), dim=1).
    acc = jnp.zeros((B, H, W), jnp.float32)
    pads = (pmax_ref, pavg_ref)
    for c in range(2):
        for ky in range(ksize):
            for kx in range(ksize):
                t = (c * ksize + ky) * ksize + kx
                win = pads[c][:, pl.ds(ky, H), pl.ds(kx, W)]
                acc = acc + w_ref[t] * win
    acc = acc + b_ref[0]                             # bias (0.0 when bias=False)

    # Spatial-attention gating: broadcast the attention map over channels.
    out_ref[...] = x * acc[:, None, :, :]


def sam_forward(x, conv_w, conv_b=None):
    """x: (B, C, H, W) f32. conv_w: (1, 2, K, K) (PyTorch OIHW). conv_b: (1,) or None."""
    B, C, H, W = x.shape
    K = conv_w.shape[-1]
    P = K // 2
    w_flat = conv_w.reshape(-1).astype(jnp.float32)          # O=1 -> order [i, ky, kx]
    b = (jnp.zeros((1,), jnp.float32) if conv_b is None
         else conv_b.reshape(1).astype(jnp.float32))

    vmem = pl.BlockSpec(memory_space=pltpu.MemorySpace.VMEM)
    smem = pl.BlockSpec(memory_space=pltpu.MemorySpace.SMEM)
    return pl.pallas_call(
        functools.partial(sam_kernel, ksize=K),
        out_shape=jax.ShapeDtypeStruct((B, C, H, W), jnp.float32),
        in_specs=[vmem, smem, smem],
        out_specs=vmem,
        scratch_shapes=[
            pltpu.VMEM((B, H + 2 * P, W + 2 * P), jnp.float32),
            pltpu.VMEM((B, H + 2 * P, W + 2 * P), jnp.float32),
        ],
    )(x.astype(jnp.float32), w_flat, b)


def sam_ref(x, conv_w, conv_b=None):
    """Pure-JAX reference mirroring the PyTorch SAM.forward."""
    mx = jnp.max(x, axis=1, keepdims=True)
    av = jnp.mean(x, axis=1, keepdims=True)
    cat = jnp.concatenate([mx, av], axis=1)
    P = conv_w.shape[-1] // 2
    attn = jax.lax.conv_general_dilated(
        cat, conv_w, window_strides=(1, 1), padding=((P, P), (P, P)),
        dimension_numbers=("NCHW", "OIHW", "NCHW"))
    if conv_b is not None:
        attn = attn + conv_b.reshape(1, -1, 1, 1)
    return attn * x


if __name__ == "__main__":
    # Small shapes consistent with the module's forward: x is NCHW.
    batch, channels, height, width = 2, 4, 16, 16
    K = 7

    key = jax.random.PRNGKey(0)
    k_x, k_w = jax.random.split(key)
    x = jax.random.normal(k_x, (batch, channels, height, width), jnp.float32)
    # PyTorch Conv2d default init: U(-1/sqrt(fan_in), 1/sqrt(fan_in)), fan_in = 2*K*K.
    bound = 1.0 / (2 * K * K) ** 0.5
    conv_w = jax.random.uniform(k_w, (1, 2, K, K), jnp.float32, -bound, bound)
    conv_b = None   # SAM() default is bias=False

    out = sam_forward(x, conv_w, conv_b)
    jax.block_until_ready(out)

    ref = sam_ref(x, conv_w, conv_b)
    assert out.shape == x.shape
    assert jnp.allclose(out, ref, atol=1e-4, rtol=1e-4), float(jnp.max(jnp.abs(out - ref)))

    print("KERNEL_OK")
</pallas_src>

<mosaic_0001>
module attributes {stable_mosaic.version = 11 : i64} {
  func.func @sam_kernel(%arg0: memref<2x4x16x16xf32, #tpu.memory_space<vmem>>, %arg1: memref<98xf32, #tpu.memory_space<smem>>, %arg2: memref<1xf32, #tpu.memory_space<smem>>, %arg3: memref<2x4x16x16xf32, #tpu.memory_space<vmem>>, %arg4: memref<2x22x22xf32, #tpu.memory_space<vmem>>, %arg5: memref<2x22x22xf32, #tpu.memory_space<vmem>>) attributes {dimension_semantics = [], scalar_prefetch = 0 : i64, scratch_operands = 2 : i64, tpu.core_type = #tpu.core_type<tc>} {
    %c0 = arith.constant 0 : index
    %c0_0 = arith.constant 0 : index
    %c0_1 = arith.constant 0 : index
    %c0_2 = arith.constant 0 : index
    %0 = vector.load %arg0[%c0, %c0_0, %c0_1, %c0_2] : memref<2x4x16x16xf32, #tpu.memory_space<vmem>>, vector<2x4x16x16xf32>
    %1 = vector.extract_strided_slice %0 {offsets = [0, 0, 0, 0], sizes = [2, 1, 16, 16], strides = [1, 1, 1, 1]} : vector<2x4x16x16xf32> to vector<2x1x16x16xf32>
    %2 = vector.shape_cast %1 : vector<2x1x16x16xf32> to vector<2x16x16xf32>
    %3 = vector.extract_strided_slice %0 {offsets = [0, 0, 0, 0], sizes = [2, 1, 16, 16], strides = [1, 1, 1, 1]} : vector<2x4x16x16xf32> to vector<2x1x16x16xf32>
    %4 = vector.shape_cast %3 : vector<2x1x16x16xf32> to vector<2x16x16xf32>
    %5 = vector.extract_strided_slice %0 {offsets = [0, 1, 0, 0], sizes = [2, 1, 16, 16], strides = [1, 1, 1, 1]} : vector<2x4x16x16xf32> to vector<2x1x16x16xf32>
    %6 = vector.shape_cast %5 : vector<2x1x16x16xf32> to vector<2x16x16xf32>
    %7 = arith.maximumf %2, %6 : vector<2x16x16xf32>
    %8 = vector.extract_strided_slice %0 {offsets = [0, 1, 0, 0], sizes = [2, 1, 16, 16], strides = [1, 1, 1, 1]} : vector<2x4x16x16xf32> to vector<2x1x16x16xf32>
    %9 = vector.shape_cast %8 : vector<2x1x16x16xf32> to vector<2x16x16xf32>
    %10 = arith.addf %4, %9 : vector<2x16x16xf32>
    %11 = vector.extract_strided_slice %0 {offsets = [0, 2, 0, 0], sizes = [2, 1, 16, 16], strides = [1, 1, 1, 1]} : vector<2x4x16x16xf32> to vector<2x1x16x16xf32>
    %12 = vector.shape_cast %11 : vector<2x1x16x16xf32> to vector<2x16x16xf32>
    %13 = arith.maximumf %7, %12 : vector<2x16x16xf32>
    %14 = vector.extract_strided_slice %0 {offsets = [0, 2, 0, 0], sizes = [2, 1, 16, 16], strides = [1, 1, 1, 1]} : vector<2x4x16x16xf32> to vector<2x1x16x16xf32>
    %15 = vector.shape_cast %14 : vector<2x1x16x16xf32> to vector<2x16x16xf32>
    %16 = arith.addf %10, %15 : vector<2x16x16xf32>
    %17 = vector.extract_strided_slice %0 {offsets = [0, 3, 0, 0], sizes = [2, 1, 16, 16], strides = [1, 1, 1, 1]} : vector<2x4x16x16xf32> to vector<2x1x16x16xf32>
    %18 = vector.shape_cast %17 : vector<2x1x16x16xf32> to vector<2x16x16xf32>
    %19 = arith.maximumf %13, %18 : vector<2x16x16xf32>
    %20 = vector.extract_strided_slice %0 {offsets = [0, 3, 0, 0], sizes = [2, 1, 16, 16], strides = [1, 1, 1, 1]} : vector<2x4x16x16xf32> to vector<2x1x16x16xf32>
    %21 = vector.shape_cast %20 : vector<2x1x16x16xf32> to vector<2x16x16xf32>
    %22 = arith.addf %16, %21 : vector<2x16x16xf32>
    %cst = arith.constant 2.500000e-01 : f32
    %23 = vector.broadcast %cst : f32 to vector<2x16x16xf32>
    %24 = arith.mulf %22, %23 : vector<2x16x16xf32>
    %cst_3 = arith.constant 0.000000e+00 : f32
    %25 = vector.broadcast %cst_3 : f32 to vector<2x22x22xf32>
    %c0_4 = arith.constant 0 : index
    %c0_5 = arith.constant 0 : index
    %c0_6 = arith.constant 0 : index
    %26 = vector.load %arg4[%c0_4, %c0_5, %c0_6] : memref<2x22x22xf32, #tpu.memory_space<vmem>>, vector<2x22x22xf32>
    tpu.vector_store %arg4[%c0_4, %c0_5, %c0_6], %25 {strides = array<i32>} : memref<2x22x22xf32, #tpu.memory_space<vmem>>, vector<2x22x22xf32>,
    %cst_7 = arith.constant 0.000000e+00 : f32
    %27 = vector.broadcast %cst_7 : f32 to vector<2x22x22xf32>
    %c0_8 = arith.constant 0 : index
    %c0_9 = arith.constant 0 : index
    %c0_10 = arith.constant 0 : index
    %28 = vector.load %arg5[%c0_8, %c0_9, %c0_10] : memref<2x22x22xf32, #tpu.memory_space<vmem>>, vector<2x22x22xf32>
    tpu.vector_store %arg5[%c0_8, %c0_9, %c0_10], %27 {strides = array<i32>} : memref<2x22x22xf32, #tpu.memory_space<vmem>>, vector<2x22x22xf32>,
    %c0_11 = arith.constant 0 : index
    %c3 = arith.constant 3 : index
    %c3_12 = arith.constant 3 : index
    %29 = vector.load %arg4[%c0_11, %c3, %c3_12] : memref<2x22x22xf32, #tpu.memory_space<vmem>>, vector<2x16x16xf32>
    tpu.vector_store %arg4[%c0_11, %c3, %c3_12], %19 {strides = array<i32>} : memref<2x22x22xf32, #tpu.memory_space<vmem>>, vector<2x16x16xf32>,
    %c0_13 = arith.constant 0 : index
    %c3_14 = arith.constant 3 : index
    %c3_15 = arith.constant 3 : index
    %30 = vector.load %arg5[%c0_13, %c3_14, %c3_15] : memref<2x22x22xf32, #tpu.memory_space<vmem>>, vector<2x16x16xf32>
    tpu.vector_store %arg5[%c0_13, %c3_14, %c3_15], %24 {strides = array<i32>} : memref<2x22x22xf32, #tpu.memory_space<vmem>>, vector<2x16x16xf32>,
    %cst_16 = arith.constant 0.000000e+00 : f32
    %31 = vector.broadcast %cst_16 : f32 to vector<2x16x16xf32>
    %c0_17 = arith.constant 0 : index
    %c0_18 = arith.constant 0 : index
    %c0_19 = arith.constant 0 : index
    %32 = vector.load %arg4[%c0_17, %c0_18, %c0_19] : memref<2x22x22xf32, #tpu.memory_space<vmem>>, vector<2x16x16xf32>
    %c0_20 = arith.constant 0 : index
    %33 = memref.load %arg1[%c0_20] : memref<98xf32, #tpu.memory_space<smem>>
    %34 = vector.broadcast %33 : f32 to vector<2x16x16xf32>
    %35 = arith.mulf %34, %32 : vector<2x16x16xf32>
    %36 = arith.addf %31, %35 : vector<2x16x16xf32>
    %c0_21 = arith.constant 0 : index
    %c0_22 = arith.constant 0 : index
    %c1 = arith.constant 1 : index
    %37 = vector.load %arg4[%c0_21, %c0_22, %c1] : memref<2x22x22xf32, #tpu.memory_space<vmem>>, vector<2x16x16xf32>
    %c1_23 = arith.constant 1 : index
    %38 = memref.load %arg1[%c1_23] : memref<98xf32, #tpu.memory_space<smem>>
    %39 = vector.broadcast %38 : f32 to vector<2x16x16xf32>
    %40 = arith.mulf %39, %37 : vector<2x16x16xf32>
    %41 = arith.addf %36, %40 : vector<2x16x16xf32>
    %c0_24 = arith.constant 0 : index
    %c0_25 = arith.constant 0 : index
    %c2 = arith.constant 2 : index
    %42 = vector.load %arg4[%c0_24, %c0_25, %c2] : memref<2x22x22xf32, #tpu.memory_space<vmem>>, vector<2x16x16xf32>
    %c2_26 = arith.constant 2 : index
    %43 = memref.load %arg1[%c2_26] : memref<98xf32, #tpu.memory_space<smem>>
    %44 = vector.broadcast %43 : f32 to vector<2x16x16xf32>
    %45 = arith.mulf %44, %42 : vector<2x16x16xf32>
    %46 = arith.addf %41, %45 : vector<2x16x16xf32>
    %c0_27 = arith.constant 0 : index
    %c0_28 = arith.constant 0 : index
    %c3_29 = arith.constant 3 : index
    %47 = vector.load %arg4[%c0_27, %c0_28, %c3_29] : memref<2x22x22xf32, #tpu.memory_space<vmem>>, vector<2x16x16xf32>
    %c3_30 = arith.constant 3 : index
    %48 = memref.load %arg1[%c3_30] : memref<98xf32, #tpu.memory_space<smem>>
    %49 = vector.broadcast %48 : f32 to vector<2x16x16xf32>
    %50 = arith.mulf %49, %47 : vector<2x16x16xf32>
    %51 = arith.addf %46, %50 : vector<2x16x16xf32>
    %c0_31 = arith.constant 0 : index
    %c0_32 = arith.constant 0 : index
    %c4 = arith.constant 4 : index
    %52 = vector.load %arg4[%c0_31, %c0_32, %c4] : memref<2x22x22xf32, #tpu.memory_space<vmem>>, vector<2x16x16xf32>
    %c4_33 = arith.constant 4 : index
    %53 = memref.load %arg1[%c4_33] : memref<98xf32, #tpu.memory_space<smem>>
    %54 = vector.broadcast %53 : f32 to vector<2x16x16xf32>
    %55 = arith.mulf %54, %52 : vector<2x16x16xf32>
    %56 = arith.addf %51, %55 : vector<2x16x16xf32>
    %c0_34 = arith.constant 0 : index
    %c0_35 = arith.constant 0 : index
    %c5 = arith.constant 5 : index
    %57 = vector.load %arg4[%c0_34, %c0_35, %c5] : memref<2x22x22xf32, #tpu.memory_space<vmem>>, vector<2x16x16xf32>
    %c5_36 = arith.constant 5 : index
    %58 = memref.load %arg1[%c5_36] : memref<98xf32, #tpu.memory_space<smem>>
    %59 = vector.broadcast %58 : f32 to vector<2x16x16xf32>
    %60 = arith.mulf %59, %57 : vector<2x16x16xf32>
    %61 = arith.addf %56, %60 : vector<2x16x16xf32>
    %c0_37 = arith.constant 0 : index
    %c0_38 = arith.constant 0 : index
    %c6 = arith.constant 6 : index
    %62 = vector.load %arg4[%c0_37, %c0_38, %c6] : memref<2x22x22xf32, #tpu.memory_space<vmem>>, vector<2x16x16xf32>
    %c6_39 = arith.constant 6 : index
    %63 = memref.load %arg1[%c6_39] : memref<98xf32, #tpu.memory_space<smem>>
    %64 = vector.broadcast %63 : f32 to vector<2x16x16xf32>
    %65 = arith.mulf %64, %62 : vector<2x16x16xf32>
    %66 = arith.addf %61, %65 : vector<2x16x16xf32>
    %c0_40 = arith.constant 0 : index
    %c1_41 = arith.constant 1 : index
    %c0_42 = arith.constant 0 : index
    %67 = vector.load %arg4[%c0_40, %c1_41, %c0_42] : memref<2x22x22xf32, #tpu.memory_space<vmem>>, vector<2x16x16xf32>
    %c7 = arith.constant 7 : index
    %68 = memref.load %arg1[%c7] : memref<98xf32, #tpu.memory_space<smem>>
    %69 = vector.broadcast %68 : f32 to vector<2x16x16xf32>
    %70 = arith.mulf %69, %67 : vector<2x16x16xf32>
    %71 = arith.addf %66, %70 : vector<2x16x16xf32>
    %c0_43 = arith.constant 0 : index
    %c1_44 = arith.constant 1 : index
    %c1_45 = arith.constant 1 : index
    %72 = vector.load %arg4[%c0_43, %c1_44, %c1_45] : memref<2x22x22xf32, #tpu.memory_space<vmem>>, vector<2x16x16xf32>
    %c8 = arith.constant 8 : index
    %73 = memref.load %arg1[%c8] : memref<98xf32, #tpu.memory_space<smem>>
    %74 = vector.broadcast %73 : f32 to vector<2x16x16xf32>
    %75 = arith.mulf %74, %72 : vector<2x16x16xf32>
    %76 = arith.addf %71, %75 : vector<2x16x16xf32>
    %c0_46 = arith.constant 0 : index
    %c1_47 = arith.constant 1 : index
    %c2_48 = arith.constant 2 : index
    %77 = vector.load %arg4[%c0_46, %c1_47, %c2_48] : memref<2x22x22xf32, #tpu.memory_space<vmem>>, vector<2x16x16xf32>
    %c9 = arith.constant 9 : index
    %78 = memref.load %arg1[%c9] : memref<98xf32, #tpu.memory_space<smem>>
    %79 = vector.broadcast %78 : f32 to vector<2x16x16xf32>
    %80 = arith.mulf %79, %77 : vector<2x16x16xf32>
    %81 = arith.addf %76, %80 : vector<2x16x16xf32>
    %c0_49 = arith.constant 0 : index
    %c1_50 = arith.constant 1 : index
    %c3_51 = arith.constant 3 : index
    %82 = vector.load %arg4[%c0_49, %c1_50, %c3_51] : memref<2x22x22xf32, #tpu.memory_space<vmem>>, vector<2x16x16xf32>
    %c10 = arith.constant 10 : index
    %83 = memref.load %arg1[%c10] : memref<98xf32, #tpu.memory_space<smem>>
    %84 = vector.broadcast %83 : f32 to vector<2x16x16xf32>
    %85 = arith.mulf %84, %82 : vector<2x16x16xf32>
    %86 = arith.addf %81, %85 : vector<2x16x16xf32>
    %c0_52 = arith.constant 0 : index
    %c1_53 = arith.constant 1 : index
    %c4_54 = arith.constant 4 : index
    %87 = vector.load %arg4[%c0_52, %c1_53, %c4_54] : memref<2x22x22xf32, #tpu.memory_space<vmem>>, vector<2x16x16xf32>
    %c11 = arith.constant 11 : index
    %88 = memref.load %arg1[%c11] : memref<98xf32, #tpu.memory_space<smem>>
    %89 = vector.broadcast %88 : f32 to vector<2x16x16xf32>
    %90 = arith.mulf %89, %87 : vector<2x16x16xf32>
    %91 = arith.addf %86, %90 : vector<2x16x16xf32>
    %c0_55 = arith.constant 0 : index
    %c1_56 = arith.constant 1 : index
    %c5_57 = arith.constant 5 : index
    %92 = vector.load %arg4[%c0_55, %c1_56, %c5_57] : memref<2x22x22xf32, #tpu.memory_space<vmem>>, vector<2x16x16xf32>
    %c12 = arith.constant 12 : index
    %93 = memref.load %arg1[%c12] : memref<98xf32, #tpu.memory_space<smem>>
    %94 = vector.broadcast %93 : f32 to vector<2x16x16xf32>
    %95 = arith.mulf %94, %92 : vector<2x16x16xf32>
    %96 = arith.addf %91, %95 : vector<2x16x16xf32>
    %c0_58 = arith.constant 0 : index
    %c1_59 = arith.constant 1 : index
    %c6_60 = arith.constant 6 : index
    %97 = vector.load %arg4[%c0_58, %c1_59, %c6_60] : memref<2x22x22xf32, #tpu.memory_space<vmem>>, vector<2x16x16xf32>
    %c13 = arith.constant 13 : index
    %98 = memref.load %arg1[%c13] : memref<98xf32, #tpu.memory_space<smem>>
    %99 = vector.broadcast %98 : f32 to vector<2x16x16xf32>
    %100 = arith.mulf %99, %97 : vector<2x16x16xf32>
    %101 = arith.addf %96, %100 : vector<2x16x16xf32>
    %c0_61 = arith.constant 0 : index
    %c2_62 = arith.constant 2 : index
    %c0_63 = arith.constant 0 : index
    %102 = vector.load %arg4[%c0_61, %c2_62, %c0_63] : memref<2x22x22xf32, #tpu.memory_space<vmem>>, vector<2x16x16xf32>
    %c14 = arith.constant 14 : index
    %103 = memref.load %arg1[%c14] : memref<98xf32, #tpu.memory_space<smem>>
    %104 = vector.broadcast %103 : f32 to vector<2x16x16xf32>
    %105 = arith.mulf %104, %102 : vector<2x16x16xf32>
    %106 = arith.addf %101, %105 : vector<2x16x16xf32>
    %c0_64 = arith.constant 0 : index
    %c2_65 = arith.constant 2 : index
    %c1_66 = arith.constant 1 : index
    %107 = vector.load %arg4[%c0_64, %c2_65, %c1_66] : memref<2x22x22xf32, #tpu.memory_space<vmem>>, vector<2x16x16xf32>
    %c15 = arith.constant 15 : index
    %108 = memref.load %arg1[%c15] : memref<98xf32, #tpu.memory_space<smem>>
    %109 = vector.broadcast %108 : f32 to vector<2x16x16xf32>
    %110 = arith.mulf %109, %107 : vector<2x16x16xf32>
    %111 = arith.addf %106, %110 : vector<2x16x16xf32>
    %c0_67 = arith.constant 0 : index
    %c2_68 = arith.constant 2 : index
    %c2_69 = arith.constant 2 : index
    %112 = vector.load %arg4[%c0_67, %c2_68, %c2_69] : memref<2x22x22xf32, #tpu.memory_space<vmem>>, vector<2x16x16xf32>
    %c16 = arith.constant 16 : index
    %113 = memref.load %arg1[%c16] : memref<98xf32, #tpu.memory_space<smem>>
    %114 = vector.broadcast %113 : f32 to vector<2x16x16xf32>
    %115 = arith.mulf %114, %112 : vector<2x16x16xf32>
    %116 = arith.addf %111, %115 : vector<2x16x16xf32>
    %c0_70 = arith.constant 0 : index
    %c2_71 = arith.constant 2 : index
    %c3_72 = arith.constant 3 : index
    %117 = vector.load %arg4[%c0_70, %c2_71, %c3_72] : memref<2x22x22xf32, #tpu.memory_space<vmem>>, vector<2x16x16xf32>
    %c17 = arith.constant 17 : index
    %118 = memref.load %arg1[%c17] : memref<98xf32, #tpu.memory_space<smem>>
    %119 = vector.broadcast %118 : f32 to vector<2x16x16xf32>
    %120 = arith.mulf %119, %117 : vector<2x16x16xf32>
    %121 = arith.addf %116, %120 : vector<2x16x16xf32>
    %c0_73 = arith.constant 0 : index
    %c2_74 = arith.constant 2 : index
    %c4_75 = arith.constant 4 : index
    %122 = vector.load %arg4[%c0_73, %c2_74, %c4_75] : memref<2x22x22xf32, #tpu.memory_space<vmem>>, vector<2x16x16xf32>
    %c18 = arith.constant 18 : index
    %123 = memref.load %arg1[%c18] : memref<98xf32, #tpu.memory_space<smem>>
    %124 = vector.broadcast %123 : f32 to vector<2x16x16xf32>
    %125 = arith.mulf %124, %122 : vector<2x16x16xf32>
    %126 = arith.addf %121, %125 : vector<2x16x16xf32>
    %c0_76 = arith.constant 0 : index
    %c2_77 = arith.constant 2 : index
    %c5_78 = arith.constant 5 : index
    %127 = vector.load %arg4[%c0_76, %c2_77, %c5_78] : memref<2x22x22xf32, #tpu.memory_space<vmem>>, vector<2x16x16xf32>
    %c19 = arith.constant 19 : index
    %128 = memref.load %arg1[%c19] : memref<98xf32, #tpu.memory_space<smem>>
    %129 = vector.broadcast %128 : f32 to vector<2x16x16xf32>
    %130 = arith.mulf %129, %127 : vector<2x16x16xf32>
    %131 = arith.addf %126, %130 : vector<2x16x16xf32>
    %c0_79 = arith.constant 0 : index
    %c2_80 = arith.constant 2 : index
    %c6_81 = arith.constant 6 : index
    %132 = vector.load %arg4[%c0_79, %c2_80, %c6_81] : memref<2x22x22xf32, #tpu.memory_space<vmem>>, vector<2x16x16xf32>
    %c20 = arith.constant 20 : index
    %133 = memref.load %arg1[%c20] : memref<98xf32, #tpu.memory_space<smem>>
    %134 = vector.broadcast %133 : f32 to vector<2x16x16xf32>
    %135 = arith.mulf %134, %132 : vector<2x16x16xf32>
    %136 = arith.addf %131, %135 : vector<2x16x16xf32>
    %c0_82 = arith.constant 0 : index
    %c3_83 = arith.constant 3 : index
    %c0_84 = arith.constant 0 : index
    %137 = vector.load %arg4[%c0_82, %c3_83, %c0_84] : memref<2x22x22xf32, #tpu.memory_space<vmem>>, vector<2x16x16xf32>
    %c21 = arith.constant 21 : index
    %138 = memref.load %arg1[%c21] : memref<98xf32, #tpu.memory_space<smem>>
    %139 = vector.broadcast %138 : f32 to vector<2x16x16xf32>
    %140 = arith.mulf %139, %137 : vector<2x16x16xf32>
    %141 = arith.addf %136, %140 : vector<2x16x16xf32>
    %c0_85 = arith.constant 0 : index
    %c3_86 = arith.constant 3 : index
    %c1_87 = arith.constant 1 : index
    %142 = vector.load %arg4[%c0_85, %c3_86, %c1_87] : memref<2x22x22xf32, #tpu.memory_space<vmem>>, vector<2x16x16xf32>
    %c22 = arith.constant 22 : index
    %143 = memref.load %arg1[%c22] : memref<98xf32, #tpu.memory_space<smem>>
    %144 = vector.broadcast %143 : f32 to vector<2x16x16xf32>
    %145 = arith.mulf %144, %142 : vector<2x16x16xf32>
    %146 = arith.addf %141, %145 : vector<2x16x16xf32>
    %c0_88 = arith.constant 0 : index
    %c3_89 = arith.constant 3 : index
    %c2_90 = arith.constant 2 : index
    %147 = vector.load %arg4[%c0_88, %c3_89, %c2_90] : memref<2x22x22xf32, #tpu.memory_space<vmem>>, vector<2x16x16xf32>
    %c23 = arith.constant 23 : index
    %148 = memref.load %arg1[%c23] : memref<98xf32, #tpu.memory_space<smem>>
    %149 = vector.broadcast %148 : f32 to vector<2x16x16xf32>
    %150 = arith.mulf %149, %147 : vector<2x16x16xf32>
    %151 = arith.addf %146, %150 : vector<2x16x16xf32>
    %c0_91 = arith.constant 0 : index
    %c3_92 = arith.constant 3 : index
    %c3_93 = arith.constant 3 : index
    %152 = vector.load %arg4[%c0_91, %c3_92, %c3_93] : memref<2x22x22xf32, #tpu.memory_space<vmem>>, vector<2x16x16xf32>
    %c24 = arith.constant 24 : index
    %153 = memref.load %arg1[%c24] : memref<98xf32, #tpu.memory_space<smem>>
    %154 = vector.broadcast %153 : f32 to vector<2x16x16xf32>
    %155 = arith.mulf %154, %152 : vector<2x16x16xf32>
    %156 = arith.addf %151, %155 : vector<2x16x16xf32>
    %c0_94 = arith.constant 0 : index
    %c3_95 = arith.constant 3 : index
    %c4_96 = arith.constant 4 : index
    %157 = vector.load %arg4[%c0_94, %c3_95, %c4_96] : memref<2x22x22xf32, #tpu.memory_space<vmem>>, vector<2x16x16xf32>
    %c25 = arith.constant 25 : index
    %158 = memref.load %arg1[%c25] : memref<98xf32, #tpu.memory_space<smem>>
    %159 = vector.broadcast %158 : f32 to vector<2x16x16xf32>
    %160 = arith.mulf %159, %157 : vector<2x16x16xf32>
    %161 = arith.addf %156, %160 : vector<2x16x16xf32>
    %c0_97 = arith.constant 0 : index
    %c3_98 = arith.constant 3 : index
    %c5_99 = arith.constant 5 : index
    %162 = vector.load %arg4[%c0_97, %c3_98, %c5_99] : memref<2x22x22xf32, #tpu.memory_space<vmem>>, vector<2x16x16xf32>
    %c26 = arith.constant 26 : index
    %163 = memref.load %arg1[%c26] : memref<98xf32, #tpu.memory_space<smem>>
    %164 = vector.broadcast %163 : f32 to vector<2x16x16xf32>
    %165 = arith.mulf %164, %162 : vector<2x16x16xf32>
    %166 = arith.addf %161, %165 : vector<2x16x16xf32>
    %c0_100 = arith.constant 0 : index
    %c3_101 = arith.constant 3 : index
    %c6_102 = arith.constant 6 : index
    %167 = vector.load %arg4[%c0_100, %c3_101, %c6_102] : memref<2x22x22xf32, #tpu.memory_space<vmem>>, vector<2x16x16xf32>
    %c27 = arith.constant 27 : index
    %168 = memref.load %arg1[%c27] : memref<98xf32, #tpu.memory_space<smem>>
    %169 = vector.broadcast %168 : f32 to vector<2x16x16xf32>
    %170 = arith.mulf %169, %167 : vector<2x16x16xf32>
    %171 = arith.addf %166, %170 : vector<2x16x16xf32>
    %c0_103 = arith.constant 0 : index
    %c4_104 = arith.constant 4 : index
    %c0_105 = arith.constant 0 : index
    %172 = vector.load %arg4[%c0_103, %c4_104, %c0_105] : memref<2x22x22xf32, #tpu.memory_space<vmem>>, vector<2x16x16xf32>
    %c28 = arith.constant 28 : index
    %173 = memref.load %arg1[%c28] : memref<98xf32, #tpu.memory_space<smem>>
    %174 = vector.broadcast %173 : f32 to vector<2x16x16xf32>
    %175 = arith.mulf %174, %172 : vector<2x16x16xf32>
    %176 = arith.addf %171, %175 : vector<2x16x16xf32>
    %c0_106 = arith.constant 0 : index
    %c4_107 = arith.constant 4 : index
    %c1_108 = arith.constant 1 : index
    %177 = vector.load %arg4[%c0_106, %c4_107, %c1_108] : memref<2x22x22xf32, #tpu.memory_space<vmem>>, vector<2x16x16xf32>
    %c29 = arith.constant 29 : index
    %178 = memref.load %arg1[%c29] : memref<98xf32, #tpu.memory_space<smem>>
    %179 = vector.broadcast %178 : f32 to vector<2x16x16xf32>
    %180 = arith.mulf %179, %177 : vector<2x16x16xf32>
    %181 = arith.addf %176, %180 : vector<2x16x16xf32>
    %c0_109 = arith.constant 0 : index
    %c4_110 = arith.constant 4 : index
    %c2_111 = arith.constant 2 : index
    %182 = vector.load %arg4[%c0_109, %c4_110, %c2_111] : memref<2x22x22xf32, #tpu.memory_space<vmem>>, vector<2x16x16xf32>
    %c30 = arith.constant 30 : index
    %183 = memref.load %arg1[%c30] : memref<98xf32, #tpu.memory_space<smem>>
    %184 = vector.broadcast %183 : f32 to vector<2x16x16xf32>
    %185 = arith.mulf %184, %182 : vector<2x16x16xf32>
    %186 = arith.addf %181, %185 : vector<2x16x16xf32>
    %c0_112 = arith.constant 0 : index
    %c4_113 = arith.constant 4 : index
    %c3_114 = arith.constant 3 : index
    %187 = vector.load %arg4[%c0_112, %c4_113, %c3_114] : memref<2x22x22xf32, #tpu.memory_space<vmem>>, vector<2x16x16xf32>
    %c31 = arith.constant 31 : index
    %188 = memref.load %arg1[%c31] : memref<98xf32, #tpu.memory_space<smem>>
    %189 = vector.broadcast %188 : f32 to vector<2x16x16xf32>
    %190 = arith.mulf %189, %187 : vector<2x16x16xf32>
    %191 = arith.addf %186, %190 : vector<2x16x16xf32>
    %c0_115 = arith.constant 0 : index
    %c4_116 = arith.constant 4 : index
    %c4_117 = arith.constant 4 : index
    %192 = vector.load %arg4[%c0_115, %c4_116, %c4_117] : memref<2x22x22xf32, #tpu.memory_space<vmem>>, vector<2x16x16xf32>
    %c32 = arith.constant 32 : index
    %193 = memref.load %arg1[%c32] : memref<98xf32, #tpu.memory_space<smem>>
    %194 = vector.broadcast %193 : f32 to vector<2x16x16xf32>
    %195 = arith.mulf %194, %192 : vector<2x16x16xf32>
    %196 = arith.addf %191, %195 : vector<2x16x16xf32>
    %c0_118 = arith.constant 0 : index
    %c4_119 = arith.constant 4 : index
    %c5_120 = arith.constant 5 : index
    %197 = vector.load %arg4[%c0_118, %c4_119, %c5_120] : memref<2x22x22xf32, #tpu.memory_space<vmem>>, vector<2x16x16xf32>
    %c33 = arith.constant 33 : index
    %198 = memref.load %arg1[%c33] : memref<98xf32, #tpu.memory_space<smem>>
    %199 = vector.broadcast %198 : f32 to vector<2x16x16xf32>
    %200 = arith.mulf %199, %197 : vector<2x16x16xf32>
    %201 = arith.addf %196, %200 : vector<2x16x16xf32>
    %c0_121 = arith.constant 0 : index
    %c4_122 = arith.constant 4 : index
    %c6_123 = arith.constant 6 : index
    %202 = vector.load %arg4[%c0_121, %c4_122, %c6_123] : memref<2x22x22xf32, #tpu.memory_space<vmem>>, vector<2x16x16xf32>
    %c34 = arith.constant 34 : index
    %203 = memref.load %arg1[%c34] : memref<98xf32, #tpu.memory_space<smem>>
    %204 = vector.broadcast %203 : f32 to vector<2x16x16xf32>
    %205 = arith.mulf %204, %202 : vector<2x16x16xf32>
    %206 = arith.addf %201, %205 : vector<2x16x16xf32>
    %c0_124 = arith.constant 0 : index
    %c5_125 = arith.constant 5 : index
    %c0_126 = arith.constant 0 : index
    %207 = vector.load %arg4[%c0_124, %c5_125, %c0_126] : memref<2x22x22xf32, #tpu.memory_space<vmem>>, vector<2x16x16xf32>
    %c35 = arith.constant 35 : index
    %208 = memref.load %arg1[%c35] : memref<98xf32, #tpu.memory_space<smem>>
    %209 = vector.broadcast %208 : f32 to vector<2x16x16xf32>
    %210 = arith.mulf %209, %207 : vector<2x16x16xf32>
    %211 = arith.addf %206, %210 : vector<2x16x16xf32>
    %c0_127 = arith.constant 0 : index
    %c5_128 = arith.constant 5 : index
    %c1_129 = arith.constant 1 : index
    %212 = vector.load %arg4[%c0_127, %c5_128, %c1_129] : memref<2x22x22xf32, #tpu.memory_space<vmem>>, vector<2x16x16xf32>
    %c36 = arith.constant 36 : index
    %213 = memref.load %arg1[%c36] : memref<98xf32, #tpu.memory_space<smem>>
    %214 = vector.broadcast %213 : f32 to vector<2x16x16xf32>
    %215 = arith.mulf %214, %212 : vector<2x16x16xf32>
    %216 = arith.addf %211, %215 : vector<2x16x16xf32>
    %c0_130 = arith.constant 0 : index
    %c5_131 = arith.constant 5 : index
    %c2_132 = arith.constant 2 : index
    %217 = vector.load %arg4[%c0_130, %c5_131, %c2_132] : memref<2x22x22xf32, #tpu.memory_space<vmem>>, vector<2x16x16xf32>
    %c37 = arith.constant 37 : index
    %218 = memref.load %arg1[%c37] : memref<98xf32, #tpu.memory_space<smem>>
    %219 = vector.broadcast %218 : f32 to vector<2x16x16xf32>
    %220 = arith.mulf %219, %217 : vector<2x16x16xf32>
    %221 = arith.addf %216, %220 : vector<2x16x16xf32>
    %c0_133 = arith.constant 0 : index
    %c5_134 = arith.constant 5 : index
    %c3_135 = arith.constant 3 : index
    %222 = vector.load %arg4[%c0_133, %c5_134, %c3_135] : memref<2x22x22xf32, #tpu.memory_space<vmem>>, vector<2x16x16xf32>
    %c38 = arith.constant 38 : index
    %223 = memref.load %arg1[%c38] : memref<98xf32, #tpu.memory_space<smem>>
    %224 = vector.broadcast %223 : f32 to vector<2x16x16xf32>
    %225 = arith.mulf %224, %222 : vector<2x16x16xf32>
    %226 = arith.addf %221, %225 : vector<2x16x16xf32>
    %c0_136 = arith.constant 0 : index
    %c5_137 = arith.constant 5 : index
    %c4_138 = arith.constant 4 : index
    %227 = vector.load %arg4[%c0_136, %c5_137, %c4_138] : memref<2x22x22xf32, #tpu.memory_space<vmem>>, vector<2x16x16xf32>
    %c39 = arith.constant 39 : index
    %228 = memref.load %arg1[%c39] : memref<98xf32, #tpu.memory_space<smem>>
    %229 = vector.broadcast %228 : f32 to vector<2x16x16xf32>
    %230 = arith.mulf %229, %227 : vector<2x16x16xf32>
    %231 = arith.addf %226, %230 : vector<2x16x16xf32>
    %c0_139 = arith.constant 0 : index
    %c5_140 = arith.constant 5 : index
    %c5_141 = arith.constant 5 : index
    %232 = vector.load %arg4[%c0_139, %c5_140, %c5_141] : memref<2x22x22xf32, #tpu.memory_space<vmem>>, vector<2x16x16xf32>
    %c40 = arith.constant 40 : index
    %233 = memref.load %arg1[%c40] : memref<98xf32, #tpu.memory_space<smem>>
    %234 = vector.broadcast %233 : f32 to vector<2x16x16xf32>
    %235 = arith.mulf %234, %232 : vector<2x16x16xf32>
    %236 = arith.addf %231, %235 : vector<2x16x16xf32>
    %c0_142 = arith.constant 0 : index
    %c5_143 = arith.constant 5 : index
    %c6_144 = arith.constant 6 : index
    %237 = vector.load %arg4[%c0_142, %c5_143, %c6_144] : memref<2x22x22xf32, #tpu.memory_space<vmem>>, vector<2x16x16xf32>
    %c41 = arith.constant 41 : index
    %238 = memref.load %arg1[%c41] : memref<98xf32, #tpu.memory_space<smem>>
    %239 = vector.broadcast %238 : f32 to vector<2x16x16xf32>
    %240 = arith.mulf %239, %237 : vector<2x16x16xf32>
    %241 = arith.addf %236, %240 : vector<2x16x16xf32>
    %c0_145 = arith.constant 0 : index
    %c6_146 = arith.constant 6 : index
    %c0_147 = arith.constant 0 : index
    %242 = vector.load %arg4[%c0_145, %c6_146, %c0_147] : memref<2x22x22xf32, #tpu.memory_space<vmem>>, vector<2x16x16xf32>
    %c42 = arith.constant 42 : index
    %243 = memref.load %arg1[%c42] : memref<98xf32, #tpu.memory_space<smem>>
    %244 = vector.broadcast %243 : f32 to vector<2x16x16xf32>
    %245 = arith.mulf %244, %242 : vector<2x16x16xf32>
    %246 = arith.addf %241, %245 : vector<2x16x16xf32>
    %c0_148 = arith.constant 0 : index
    %c6_149 = arith.constant 6 : index
    %c1_150 = arith.constant 1 : index
    %247 = vector.load %arg4[%c0_148, %c6_149, %c1_150] : memref<2x22x22xf32, #tpu.memory_space<vmem>>, vector<2x16x16xf32>
    %c43 = arith.constant 43 : index
    %248 = memref.load %arg1[%c43] : memref<98xf32, #tpu.memory_space<smem>>
    %249 = vector.broadcast %248 : f32 to vector<2x16x16xf32>
    %250 = arith.mulf %249, %247 : vector<2x16x16xf32>
    %251 = arith.addf %246, %250 : vector<2x16x16xf32>
    %c0_151 = arith.constant 0 : index
    %c6_152 = arith.constant 6 : index
    %c2_153 = arith.constant 2 : index
    %252 = vector.load %arg4[%c0_151, %c6_152, %c2_153] : memref<2x22x22xf32, #tpu.memory_space<vmem>>, vector<2x16x16xf32>
    %c44 = arith.constant 44 : index
    %253 = memref.load %arg1[%c44] : memref<98xf32, #tpu.memory_space<smem>>
    %254 = vector.broadcast %253 : f32 to vector<2x16x16xf32>
    %255 = arith.mulf %254, %252 : vector<2x16x16xf32>
    %256 = arith.addf %251, %255 : vector<2x16x16xf32>
    %c0_154 = arith.constant 0 : index
    %c6_155 = arith.constant 6 : index
    %c3_156 = arith.constant 3 : index
    %257 = vector.load %arg4[%c0_154, %c6_155, %c3_156] : memref<2x22x22xf32, #tpu.memory_space<vmem>>, vector<2x16x16xf32>
    %c45 = arith.constant 45 : index
    %258 = memref.load %arg1[%c45] : memref<98xf32, #tpu.memory_space<smem>>
    %259 = vector.broadcast %258 : f32 to vector<2x16x16xf32>
    %260 = arith.mulf %259, %257 : vector<2x16x16xf32>
    %261 = arith.addf %256, %260 : vector<2x16x16xf32>
    %c0_157 = arith.constant 0 : index
    %c6_158 = arith.constant 6 : index
    %c4_159 = arith.constant 4 : index
    %262 = vector.load %arg4[%c0_157, %c6_158, %c4_159] : memref<2x22x22xf32, #tpu.memory_space<vmem>>, vector<2x16x16xf32>
    %c46 = arith.constant 46 : index
    %263 = memref.load %arg1[%c46] : memref<98xf32, #tpu.memory_space<smem>>
    %264 = vector.broadcast %263 : f32 to vector<2x16x16xf32>
    %265 = arith.mulf %264, %262 : vector<2x16x16xf32>
    %266 = arith.addf %261, %265 : vector<2x16x16xf32>
    %c0_160 = arith.constant 0 : index
    %c6_161 = arith.constant 6 : index
    %c5_162 = arith.constant 5 : index
    %267 = vector.load %arg4[%c0_160, %c6_161, %c5_162] : memref<2x22x22xf32, #tpu.memory_space<vmem>>, vector<2x16x16xf32>
    %c47 = arith.constant 47 : index
    %268 = memref.load %arg1[%c47] : memref<98xf32, #tpu.memory_space<smem>>
    %269 = vector.broadcast %268 : f32 to vector<2x16x16xf32>
    %270 = arith.mulf %269, %267 : vector<2x16x16xf32>
    %271 = arith.addf %266, %270 : vector<2x16x16xf32>
    %c0_163 = arith.constant 0 : index
    %c6_164 = arith.constant 6 : index
    %c6_165 = arith.constant 6 : index
    %272 = vector.load %arg4[%c0_163, %c6_164, %c6_165] : memref<2x22x22xf32, #tpu.memory_space<vmem>>, vector<2x16x16xf32>
    %c48 = arith.constant 48 : index
    %273 = memref.load %arg1[%c48] : memref<98xf32, #tpu.memory_space<smem>>
    %274 = vector.broadcast %273 : f32 to vector<2x16x16xf32>
    %275 = arith.mulf %274, %272 : vector<2x16x16xf32>
    %276 = arith.addf %271, %275 : vector<2x16x16xf32>
    %c0_166 = arith.constant 0 : index
    %c0_167 = arith.constant 0 : index
    %c0_168 = arith.constant 0 : index
    %277 = vector.load %arg5[%c0_166, %c0_167, %c0_168] : memref<2x22x22xf32, #tpu.memory_space<vmem>>, vector<2x16x16xf32>
    %c49 = arith.constant 49 : index
    %278 = memref.load %arg1[%c49] : memref<98xf32, #tpu.memory_space<smem>>
    %279 = vector.broadcast %278 : f32 to vector<2x16x16xf32>
    %280 = arith.mulf %279, %277 : vector<2x16x16xf32>
    %281 = arith.addf %276, %280 : vector<2x16x16xf32>
    %c0_169 = arith.constant 0 : index
    %c0_170 = arith.constant 0 : index
    %c1_171 = arith.constant 1 : index
    %282 = vector.load %arg5[%c0_169, %c0_170, %c1_171] : memref<2x22x22xf32, #tpu.memory_space<vmem>>, vector<2x16x16xf32>
    %c50 = arith.constant 50 : index
    %283 = memref.load %arg1[%c50] : memref<98xf32, #tpu.memory_space<smem>>
    %284 = vector.broadcast %283 : f32 to vector<2x16x16xf32>
    %285 = arith.mulf %284, %282 : vector<2x16x16xf32>
    %286 = arith.addf %281, %285 : vector<2x16x16xf32>
    %c0_172 = arith.constant 0 : index
    %c0_173 = arith.constant 0 : index
    %c2_174 = arith.constant 2 : index
    %287 = vector.load %arg5[%c0_172, %c0_173, %c2_174] : memref<2x22x22xf32, #tpu.memory_space<vmem>>, vector<2x16x16xf32>
    %c51 = arith.constant 51 : index
    %288 = memref.load %arg1[%c51] : memref<98xf32, #tpu.memory_space<smem>>
    %289 = vector.broadcast %288 : f32 to vector<2x16x16xf32>
    %290 = arith.mulf %289, %287 : vector<2x16x16xf32>
    %291 = arith.addf %286, %290 : vector<2x16x16xf32>
    %c0_175 = arith.constant 0 : index
    %c0_176 = arith.constant 0 : index
    %c3_177 = arith.constant 3 : index
    %292 = vector.load %arg5[%c0_175, %c0_176, %c3_177] : memref<2x22x22xf32, #tpu.memory_space<vmem>>, vector<2x16x16xf32>
    %c52 = arith.constant 52 : index
    %293 = memref.load %arg1[%c52] : memref<98xf32, #tpu.memory_space<smem>>
    %294 = vector.broadcast %293 : f32 to vector<2x16x16xf32>
    %295 = arith.mulf %294, %292 : vector<2x16x16xf32>
    %296 = arith.addf %291, %295 : vector<2x16x16xf32>
    %c0_178 = arith.constant 0 : index
    %c0_179 = arith.constant 0 : index
    %c4_180 = arith.constant 4 : index
    %297 = vector.load %arg5[%c0_178, %c0_179, %c4_180] : memref<2x22x22xf32, #tpu.memory_space<vmem>>, vector<2x16x16xf32>
    %c53 = arith.constant 53 : index
    %298 = memref.load %arg1[%c53] : memref<98xf32, #tpu.memory_space<smem>>
    %299 = vector.broadcast %298 : f32 to vector<2x16x16xf32>
    %300 = arith.mulf %299, %297 : vector<2x16x16xf32>
    %301 = arith.addf %296, %300 : vector<2x16x16xf32>
    %c0_181 = arith.constant 0 : index
    %c0_182 = arith.constant 0 : index
    %c5_183 = arith.constant 5 : index
    %302 = vector.load %arg5[%c0_181, %c0_182, %c5_183] : memref<2x22x22xf32, #tpu.memory_space<vmem>>, vector<2x16x16xf32>
    %c54 = arith.constant 54 : index
    %303 = memref.load %arg1[%c54] : memref<98xf32, #tpu.memory_space<smem>>
    %304 = vector.broadcast %303 : f32 to vector<2x16x16xf32>
    %305 = arith.mulf %304, %302 : vector<2x16x16xf32>
    %306 = arith.addf %301, %305 : vector<2x16x16xf32>
    %c0_184 = arith.constant 0 : index
    %c0_185 = arith.constant 0 : index
    %c6_186 = arith.constant 6 : index
    %307 = vector.load %arg5[%c0_184, %c0_185, %c6_186] : memref<2x22x22xf32, #tpu.memory_space<vmem>>, vector<2x16x16xf32>
    %c55 = arith.constant 55 : index
    %308 = memref.load %arg1[%c55] : memref<98xf32, #tpu.memory_space<smem>>
    %309 = vector.broadcast %308 : f32 to vector<2x16x16xf32>
    %310 = arith.mulf %309, %307 : vector<2x16x16xf32>
    %311 = arith.addf %306, %310 : vector<2x16x16xf32>
    %c0_187 = arith.constant 0 : index
    %c1_188 = arith.constant 1 : index
    %c0_189 = arith.constant 0 : index
    %312 = vector.load %arg5[%c0_187, %c1_188, %c0_189] : memref<2x22x22xf32, #tpu.memory_space<vmem>>, vector<2x16x16xf32>
    %c56 = arith.constant 56 : index
    %313 = memref.load %arg1[%c56] : memref<98xf32, #tpu.memory_space<smem>>
    %314 = vector.broadcast %313 : f32 to vector<2x16x16xf32>
    %315 = arith.mulf %314, %312 : vector<2x16x16xf32>
    %316 = arith.addf %311, %315 : vector<2x16x16xf32>
    %c0_190 = arith.constant 0 : index
    %c1_191 = arith.constant 1 : index
    %c1_192 = arith.constant 1 : index
    %317 = vector.load %arg5[%c0_190, %c1_191, %c1_192] : memref<2x22x22xf32, #tpu.memory_space<vmem>>, vector<2x16x16xf32>
    %c57 = arith.constant 57 : index
    %318 = memref.load %arg1[%c57] : memref<98xf32, #tpu.memory_space<smem>>
    %319 = vector.broadcast %318 : f32 to vector<2x16x16xf32>
    %320 = arith.mulf %319, %317 : vector<2x16x16xf32>
    %321 = arith.addf %316, %320 : vector<2x16x16xf32>
    %c0_193 = arith.constant 0 : index
    %c1_194 = arith.constant 1 : index
    %c2_195 = arith.constant 2 : index
    %322 = vector.load %arg5[%c0_193, %c1_194, %c2_195] : memref<2x22x22xf32, #tpu.memory_space<vmem>>, vector<2x16x16xf32>
    %c58 = arith.constant 58 : index
    %323 = memref.load %arg1[%c58] : memref<98xf32, #tpu.memory_space<smem>>
    %324 = vector.broadcast %323 : f32 to vector<2x16x16xf32>
    %325 = arith.mulf %324, %322 : vector<2x16x16xf32>
    %326 = arith.addf %321, %325 : vector<2x16x16xf32>
    %c0_196 = arith.constant 0 : index
    %c1_197 = arith.constant 1 : index
    %c3_198 = arith.constant 3 : index
    %327 = vector.load %arg5[%c0_196, %c1_197, %c3_198] : memref<2x22x22xf32, #tpu.memory_space<vmem>>, vector<2x16x16xf32>
    %c59 = arith.constant 59 : index
    %328 = memref.load %arg1[%c59] : memref<98xf32, #tpu.memory_space<smem>>
    %329 = vector.broadcast %328 : f32 to vector<2x16x16xf32>
    %330 = arith.mulf %329, %327 : vector<2x16x16xf32>
    %331 = arith.addf %326, %330 : vector<2x16x16xf32>
    %c0_199 = arith.constant 0 : index
    %c1_200 = arith.constant 1 : index
    %c4_201 = arith.constant 4 : index
    %332 = vector.load %arg5[%c0_199, %c1_200, %c4_201] : memref<2x22x22xf32, #tpu.memory_space<vmem>>, vector<2x16x16xf32>
    %c60 = arith.constant 60 : index
    %333 = memref.load %arg1[%c60] : memref<98xf32, #tpu.memory_space<smem>>
    %334 = vector.broadcast %333 : f32 to vector<2x16x16xf32>
    %335 = arith.mulf %334, %332 : vector<2x16x16xf32>
    %336 = arith.addf %331, %335 : vector<2x16x16xf32>
    %c0_202 = arith.constant 0 : index
    %c1_203 = arith.constant 1 : index
    %c5_204 = arith.constant 5 : index
    %337 = vector.load %arg5[%c0_202, %c1_203, %c5_204] : memref<2x22x22xf32, #tpu.memory_space<vmem>>, vector<2x16x16xf32>
    %c61 = arith.constant 61 : index
    %338 = memref.load %arg1[%c61] : memref<98xf32, #tpu.memory_space<smem>>
    %339 = vector.broadcast %338 : f32 to vector<2x16x16xf32>
    %340 = arith.mulf %339, %337 : vector<2x16x16xf32>
    %341 = arith.addf %336, %340 : vector<2x16x16xf32>
    %c0_205 = arith.constant 0 : index
    %c1_206 = arith.constant 1 : index
    %c6_207 = arith.constant 6 : index
    %342 = vector.load %arg5[%c0_205, %c1_206, %c6_207] : memref<2x22x22xf32, #tpu.memory_space<vmem>>, vector<2x16x16xf32>
    %c62 = arith.constant 62 : index
    %343 = memref.load %arg1[%c62] : memref<98xf32, #tpu.memory_space<smem>>
    %344 = vector.broadcast %343 : f32 to vector<2x16x16xf32>
    %345 = arith.mulf %344, %342 : vector<2x16x16xf32>
    %346 = arith.addf %341, %345 : vector<2x16x16xf32>
    %c0_208 = arith.constant 0 : index
    %c2_209 = arith.constant 2 : index
    %c0_210 = arith.constant 0 : index
    %347 = vector.load %arg5[%c0_208, %c2_209, %c0_210] : memref<2x22x22xf32, #tpu.memory_space<vmem>>, vector<2x16x16xf32>
    %c63 = arith.constant 63 : index
    %348 = memref.load %arg1[%c63] : memref<98xf32, #tpu.memory_space<smem>>
    %349 = vector.broadcast %348 : f32 to vector<2x16x16xf32>
    %350 = arith.mulf %349, %347 : vector<2x16x16xf32>
    %351 = arith.addf %346, %350 : vector<2x16x16xf32>
    %c0_211 = arith.constant 0 : index
    %c2_212 = arith.constant 2 : index
    %c1_213 = arith.constant 1 : index
    %352 = vector.load %arg5[%c0_211, %c2_212, %c1_213] : memref<2x22x22xf32, #tpu.memory_space<vmem>>, vector<2x16x16xf32>
    %c64 = arith.constant 64 : index
    %353 = memref.load %arg1[%c64] : memref<98xf32, #tpu.memory_space<smem>>
    %354 = vector.broadcast %353 : f32 to vector<2x16x16xf32>
    %355 = arith.mulf %354, %352 : vector<2x16x16xf32>
    %356 = arith.addf %351, %355 : vector<2x16x16xf32>
    %c0_214 = arith.constant 0 : index
    %c2_215 = arith.constant 2 : index
    %c2_216 = arith.constant 2 : index
    %357 = vector.load %arg5[%c0_214, %c2_215, %c2_216] : memref<2x22x22xf32, #tpu.memory_space<vmem>>, vector<2x16x16xf32>
    %c65 = arith.constant 65 : index
    %358 = memref.load %arg1[%c65] : memref<98xf32, #tpu.memory_space<smem>>
    %359 = vector.broadcast %358 : f32 to vector<2x16x16xf32>
    %360 = arith.mulf %359, %357 : vector<2x16x16xf32>
    %361 = arith.addf %356, %360 : vector<2x16x16xf32>
    %c0_217 = arith.constant 0 : index
    %c2_218 = arith.constant 2 : index
    %c3_219 = arith.constant 3 : index
    %362 = vector.load %arg5[%c0_217, %c2_218, %c3_219] : memref<2x22x22xf32, #tpu.memory_space<vmem>>, vector<2x16x16xf32>
    %c66 = arith.constant 66 : index
    %363 = memref.load %arg1[%c66] : memref<98xf32, #tpu.memory_space<smem>>
    %364 = vector.broadcast %363 : f32 to vector<2x16x16xf32>
    %365 = arith.mulf %364, %362 : vector<2x16x16xf32>
    %366 = arith.addf %361, %365 : vector<2x16x16xf32>
    %c0_220 = arith.constant 0 : index
    %c2_221 = arith.constant 2 : index
    %c4_222 = arith.constant 4 : index
    %367 = vector.load %arg5[%c0_220, %c2_221, %c4_222] : memref<2x22x22xf32, #tpu.memory_space<vmem>>, vector<2x16x16xf32>
    %c67 = arith.constant 67 : index
    %368 = memref.load %arg1[%c67] : memref<98xf32, #tpu.memory_space<smem>>
    %369 = vector.broadcast %368 : f32 to vector<2x16x16xf32>
    %370 = arith.mulf %369, %367 : vector<2x16x16xf32>
    %371 = arith.addf %366, %370 : vector<2x16x16xf32>
    %c0_223 = arith.constant 0 : index
    %c2_224 = arith.constant 2 : index
    %c5_225 = arith.constant 5 : index
    %372 = vector.load %arg5[%c0_223, %c2_224, %c5_225] : memref<2x22x22xf32, #tpu.memory_space<vmem>>, vector<2x16x16xf32>
    %c68 = arith.constant 68 : index
    %373 = memref.load %arg1[%c68] : memref<98xf32, #tpu.memory_space<smem>>
    %374 = vector.broadcast %373 : f32 to vector<2x16x16xf32>
    %375 = arith.mulf %374, %372 : vector<2x16x16xf32>
    %376 = arith.addf %371, %375 : vector<2x16x16xf32>
    %c0_226 = arith.constant 0 : index
    %c2_227 = arith.constant 2 : index
    %c6_228 = arith.constant 6 : index
    %377 = vector.load %arg5[%c0_226, %c2_227, %c6_228] : memref<2x22x22xf32, #tpu.memory_space<vmem>>, vector<2x16x16xf32>
    %c69 = arith.constant 69 : index
    %378 = memref.load %arg1[%c69] : memref<98xf32, #tpu.memory_space<smem>>
    %379 = vector.broadcast %378 : f32 to vector<2x16x16xf32>
    %380 = arith.mulf %379, %377 : vector<2x16x16xf32>
    %381 = arith.addf %376, %380 : vector<2x16x16xf32>
    %c0_229 = arith.constant 0 : index
    %c3_230 = arith.constant 3 : index
    %c0_231 = arith.constant 0 : index
    %382 = vector.load %arg5[%c0_229, %c3_230, %c0_231] : memref<2x22x22xf32, #tpu.memory_space<vmem>>, vector<2x16x16xf32>
    %c70 = arith.constant 70 : index
    %383 = memref.load %arg1[%c70] : memref<98xf32, #tpu.memory_space<smem>>
    %384 = vector.broadcast %383 : f32 to vector<2x16x16xf32>
    %385 = arith.mulf %384, %382 : vector<2x16x16xf32>
    %386 = arith.addf %381, %385 : vector<2x16x16xf32>
    %c0_232 = arith.constant 0 : index
    %c3_233 = arith.constant 3 : index
    %c1_234 = arith.constant 1 : index
    %387 = vector.load %arg5[%c0_232, %c3_233, %c1_234] : memref<2x22x22xf32, #tpu.memory_space<vmem>>, vector<2x16x16xf32>
    %c71 = arith.constant 71 : index
    %388 = memref.load %arg1[%c71] : memref<98xf32, #tpu.memory_space<smem>>
    %389 = vector.broadcast %388 : f32 to vector<2x16x16xf32>
    %390 = arith.mulf %389, %387 : vector<2x16x16xf32>
    %391 = arith.addf %386, %390 : vector<2x16x16xf32>
    %c0_235 = arith.constant 0 : index
    %c3_236 = arith.constant 3 : index
    %c2_237 = arith.constant 2 : index
    %392 = vector.load %arg5[%c0_235, %c3_236, %c2_237] : memref<2x22x22xf32, #tpu.memory_space<vmem>>, vector<2x16x16xf32>
    %c72 = arith.constant 72 : index
    %393 = memref.load %arg1[%c72] : memref<98xf32, #tpu.memory_space<smem>>
    %394 = vector.broadcast %393 : f32 to vector<2x16x16xf32>
    %395 = arith.mulf %394, %392 : vector<2x16x16xf32>
    %396 = arith.addf %391, %395 : vector<2x16x16xf32>
    %c0_238 = arith.constant 0 : index
    %c3_239 = arith.constant 3 : index
    %c3_240 = arith.constant 3 : index
    %397 = vector.load %arg5[%c0_238, %c3_239, %c3_240] : memref<2x22x22xf32, #tpu.memory_space<vmem>>, vector<2x16x16xf32>
    %c73 = arith.constant 73 : index
    %398 = memref.load %arg1[%c73] : memref<98xf32, #tpu.memory_space<smem>>
    %399 = vector.broadcast %398 : f32 to vector<2x16x16xf32>
    %400 = arith.mulf %399, %397 : vector<2x16x16xf32>
    %401 = arith.addf %396, %400 : vector<2x16x16xf32>
    %c0_241 = arith.constant 0 : index
    %c3_242 = arith.constant 3 : index
    %c4_243 = arith.constant 4 : index
    %402 = vector.load %arg5[%c0_241, %c3_242, %c4_243] : memref<2x22x22xf32, #tpu.memory_space<vmem>>, vector<2x16x16xf32>
    %c74 = arith.constant 74 : index
    %403 = memref.load %arg1[%c74] : memref<98xf32, #tpu.memory_space<smem>>
    %404 = vector.broadcast %403 : f32 to vector<2x16x16xf32>
    %405 = arith.mulf %404, %402 : vector<2x16x16xf32>
    %406 = arith.addf %401, %405 : vector<2x16x16xf32>
    %c0_244 = arith.constant 0 : index
    %c3_245 = arith.constant 3 : index
    %c5_246 = arith.constant 5 : index
    %407 = vector.load %arg5[%c0_244, %c3_245, %c5_246] : memref<2x22x22xf32, #tpu.memory_space<vmem>>, vector<2x16x16xf32>
    %c75 = arith.constant 75 : index
    %408 = memref.load %arg1[%c75] : memref<98xf32, #tpu.memory_space<smem>>
    %409 = vector.broadcast %408 : f32 to vector<2x16x16xf32>
    %410 = arith.mulf %409, %407 : vector<2x16x16xf32>
    %411 = arith.addf %406, %410 : vector<2x16x16xf32>
    %c0_247 = arith.constant 0 : index
    %c3_248 = arith.constant 3 : index
    %c6_249 = arith.constant 6 : index
    %412 = vector.load %arg5[%c0_247, %c3_248, %c6_249] : memref<2x22x22xf32, #tpu.memory_space<vmem>>, vector<2x16x16xf32>
    %c76 = arith.constant 76 : index
    %413 = memref.load %arg1[%c76] : memref<98xf32, #tpu.memory_space<smem>>
    %414 = vector.broadcast %413 : f32 to vector<2x16x16xf32>
    %415 = arith.mulf %414, %412 : vector<2x16x16xf32>
    %416 = arith.addf %411, %415 : vector<2x16x16xf32>
    %c0_250 = arith.constant 0 : index
    %c4_251 = arith.constant 4 : index
    %c0_252 = arith.constant 0 : index
    %417 = vector.load %arg5[%c0_250, %c4_251, %c0_252] : memref<2x22x22xf32, #tpu.memory_space<vmem>>, vector<2x16x16xf32>
    %c77 = arith.constant 77 : index
    %418 = memref.load %arg1[%c77] : memref<98xf32, #tpu.memory_space<smem>>
    %419 = vector.broadcast %418 : f32 to vector<2x16x16xf32>
    %420 = arith.mulf %419, %417 : vector<2x16x16xf32>
    %421 = arith.addf %416, %420 : vector<2x16x16xf32>
    %c0_253 = arith.constant 0 : index
    %c4_254 = arith.constant 4 : index
    %c1_255 = arith.constant 1 : index
    %422 = vector.load %arg5[%c0_253, %c4_254, %c1_255] : memref<2x22x22xf32, #tpu.memory_space<vmem>>, vector<2x16x16xf32>
    %c78 = arith.constant 78 : index
    %423 = memref.load %arg1[%c78] : memref<98xf32, #tpu.memory_space<smem>>
    %424 = vector.broadcast %423 : f32 to vector<2x16x16xf32>
    %425 = arith.mulf %424, %422 : vector<2x16x16xf32>
    %426 = arith.addf %421, %425 : vector<2x16x16xf32>
    %c0_256 = arith.constant 0 : index
    %c4_257 = arith.constant 4 : index
    %c2_258 = arith.constant 2 : index
    %427 = vector.load %arg5[%c0_256, %c4_257, %c2_258] : memref<2x22x22xf32, #tpu.memory_space<vmem>>, vector<2x16x16xf32>
    %c79 = arith.constant 79 : index
    %428 = memref.load %arg1[%c79] : memref<98xf32, #tpu.memory_space<smem>>
    %429 = vector.broadcast %428 : f32 to vector<2x16x16xf32>
    %430 = arith.mulf %429, %427 : vector<2x16x16xf32>
    %431 = arith.addf %426, %430 : vector<2x16x16xf32>
    %c0_259 = arith.constant 0 : index
    %c4_260 = arith.constant 4 : index
    %c3_261 = arith.constant 3 : index
    %432 = vector.load %arg5[%c0_259, %c4_260, %c3_261] : memref<2x22x22xf32, #tpu.memory_space<vmem>>, vector<2x16x16xf32>
    %c80 = arith.constant 80 : index
    %433 = memref.load %arg1[%c80] : memref<98xf32, #tpu.memory_space<smem>>
    %434 = vector.broadcast %433 : f32 to vector<2x16x16xf32>
    %435 = arith.mulf %434, %432 : vector<2x16x16xf32>
    %436 = arith.addf %431, %435 : vector<2x16x16xf32>
    %c0_262 = arith.constant 0 : index
    %c4_263 = arith.constant 4 : index
    %c4_264 = arith.constant 4 : index
    %437 = vector.load %arg5[%c0_262, %c4_263, %c4_264] : memref<2x22x22xf32, #tpu.memory_space<vmem>>, vector<2x16x16xf32>
    %c81 = arith.constant 81 : index
    %438 = memref.load %arg1[%c81] : memref<98xf32, #tpu.memory_space<smem>>
    %439 = vector.broadcast %438 : f32 to vector<2x16x16xf32>
    %440 = arith.mulf %439, %437 : vector<2x16x16xf32>
    %441 = arith.addf %436, %440 : vector<2x16x16xf32>
    %c0_265 = arith.constant 0 : index
    %c4_266 = arith.constant 4 : index
    %c5_267 = arith.constant 5 : index
    %442 = vector.load %arg5[%c0_265, %c4_266, %c5_267] : memref<2x22x22xf32, #tpu.memory_space<vmem>>, vector<2x16x16xf32>
    %c82 = arith.constant 82 : index
    %443 = memref.load %arg1[%c82] : memref<98xf32, #tpu.memory_space<smem>>
    %444 = vector.broadcast %443 : f32 to vector<2x16x16xf32>
    %445 = arith.mulf %444, %442 : vector<2x16x16xf32>
    %446 = arith.addf %441, %445 : vector<2x16x16xf32>
    %c0_268 = arith.constant 0 : index
    %c4_269 = arith.constant 4 : index
    %c6_270 = arith.constant 6 : index
    %447 = vector.load %arg5[%c0_268, %c4_269, %c6_270] : memref<2x22x22xf32, #tpu.memory_space<vmem>>, vector<2x16x16xf32>
    %c83 = arith.constant 83 : index
    %448 = memref.load %arg1[%c83] : memref<98xf32, #tpu.memory_space<smem>>
    %449 = vector.broadcast %448 : f32 to vector<2x16x16xf32>
    %450 = arith.mulf %449, %447 : vector<2x16x16xf32>
    %451 = arith.addf %446, %450 : vector<2x16x16xf32>
    %c0_271 = arith.constant 0 : index
    %c5_272 = arith.constant 5 : index
    %c0_273 = arith.constant 0 : index
    %452 = vector.load %arg5[%c0_271, %c5_272, %c0_273] : memref<2x22x22xf32, #tpu.memory_space<vmem>>, vector<2x16x16xf32>
    %c84 = arith.constant 84 : index
    %453 = memref.load %arg1[%c84] : memref<98xf32, #tpu.memory_space<smem>>
    %454 = vector.broadcast %453 : f32 to vector<2x16x16xf32>
    %455 = arith.mulf %454, %452 : vector<2x16x16xf32>
    %456 = arith.addf %451, %455 : vector<2x16x16xf32>
    %c0_274 = arith.constant 0 : index
    %c5_275 = arith.constant 5 : index
    %c1_276 = arith.constant 1 : index
    %457 = vector.load %arg5[%c0_274, %c5_275, %c1_276] : memref<2x22x22xf32, #tpu.memory_space<vmem>>, vector<2x16x16xf32>
    %c85 = arith.constant 85 : index
    %458 = memref.load %arg1[%c85] : memref<98xf32, #tpu.memory_space<smem>>
    %459 = vector.broadcast %458 : f32 to vector<2x16x16xf32>
    %460 = arith.mulf %459, %457 : vector<2x16x16xf32>
    %461 = arith.addf %456, %460 : vector<2x16x16xf32>
    %c0_277 = arith.constant 0 : index
    %c5_278 = arith.constant 5 : index
    %c2_279 = arith.constant 2 : index
    %462 = vector.load %arg5[%c0_277, %c5_278, %c2_279] : memref<2x22x22xf32, #tpu.memory_space<vmem>>, vector<2x16x16xf32>
    %c86 = arith.constant 86 : index
    %463 = memref.load %arg1[%c86] : memref<98xf32, #tpu.memory_space<smem>>
    %464 = vector.broadcast %463 : f32 to vector<2x16x16xf32>
    %465 = arith.mulf %464, %462 : vector<2x16x16xf32>
    %466 = arith.addf %461, %465 : vector<2x16x16xf32>
    %c0_280 = arith.constant 0 : index
    %c5_281 = arith.constant 5 : index
    %c3_282 = arith.constant 3 : index
    %467 = vector.load %arg5[%c0_280, %c5_281, %c3_282] : memref<2x22x22xf32, #tpu.memory_space<vmem>>, vector<2x16x16xf32>
    %c87 = arith.constant 87 : index
    %468 = memref.load %arg1[%c87] : memref<98xf32, #tpu.memory_space<smem>>
    %469 = vector.broadcast %468 : f32 to vector<2x16x16xf32>
    %470 = arith.mulf %469, %467 : vector<2x16x16xf32>
    %471 = arith.addf %466, %470 : vector<2x16x16xf32>
    %c0_283 = arith.constant 0 : index
    %c5_284 = arith.constant 5 : index
    %c4_285 = arith.constant 4 : index
    %472 = vector.load %arg5[%c0_283, %c5_284, %c4_285] : memref<2x22x22xf32, #tpu.memory_space<vmem>>, vector<2x16x16xf32>
    %c88 = arith.constant 88 : index
    %473 = memref.load %arg1[%c88] : memref<98xf32, #tpu.memory_space<smem>>
    %474 = vector.broadcast %473 : f32 to vector<2x16x16xf32>
    %475 = arith.mulf %474, %472 : vector<2x16x16xf32>
    %476 = arith.addf %471, %475 : vector<2x16x16xf32>
    %c0_286 = arith.constant 0 : index
    %c5_287 = arith.constant 5 : index
    %c5_288 = arith.constant 5 : index
    %477 = vector.load %arg5[%c0_286, %c5_287, %c5_288] : memref<2x22x22xf32, #tpu.memory_space<vmem>>, vector<2x16x16xf32>
    %c89 = arith.constant 89 : index
    %478 = memref.load %arg1[%c89] : memref<98xf32, #tpu.memory_space<smem>>
    %479 = vector.broadcast %478 : f32 to vector<2x16x16xf32>
    %480 = arith.mulf %479, %477 : vector<2x16x16xf32>
    %481 = arith.addf %476, %480 : vector<2x16x16xf32>
    %c0_289 = arith.constant 0 : index
    %c5_290 = arith.constant 5 : index
    %c6_291 = arith.constant 6 : index
    %482 = vector.load %arg5[%c0_289, %c5_290, %c6_291] : memref<2x22x22xf32, #tpu.memory_space<vmem>>, vector<2x16x16xf32>
    %c90 = arith.constant 90 : index
    %483 = memref.load %arg1[%c90] : memref<98xf32, #tpu.memory_space<smem>>
    %484 = vector.broadcast %483 : f32 to vector<2x16x16xf32>
    %485 = arith.mulf %484, %482 : vector<2x16x16xf32>
    %486 = arith.addf %481, %485 : vector<2x16x16xf32>
    %c0_292 = arith.constant 0 : index
    %c6_293 = arith.constant 6 : index
    %c0_294 = arith.constant 0 : index
    %487 = vector.load %arg5[%c0_292, %c6_293, %c0_294] : memref<2x22x22xf32, #tpu.memory_space<vmem>>, vector<2x16x16xf32>
    %c91 = arith.constant 91 : index
    %488 = memref.load %arg1[%c91] : memref<98xf32, #tpu.memory_space<smem>>
    %489 = vector.broadcast %488 : f32 to vector<2x16x16xf32>
    %490 = arith.mulf %489, %487 : vector<2x16x16xf32>
    %491 = arith.addf %486, %490 : vector<2x16x16xf32>
    %c0_295 = arith.constant 0 : index
    %c6_296 = arith.constant 6 : index
    %c1_297 = arith.constant 1 : index
    %492 = vector.load %arg5[%c0_295, %c6_296, %c1_297] : memref<2x22x22xf32, #tpu.memory_space<vmem>>, vector<2x16x16xf32>
    %c92 = arith.constant 92 : index
    %493 = memref.load %arg1[%c92] : memref<98xf32, #tpu.memory_space<smem>>
    %494 = vector.broadcast %493 : f32 to vector<2x16x16xf32>
    %495 = arith.mulf %494, %492 : vector<2x16x16xf32>
    %496 = arith.addf %491, %495 : vector<2x16x16xf32>
    %c0_298 = arith.constant 0 : index
    %c6_299 = arith.constant 6 : index
    %c2_300 = arith.constant 2 : index
    %497 = vector.load %arg5[%c0_298, %c6_299, %c2_300] : memref<2x22x22xf32, #tpu.memory_space<vmem>>, vector<2x16x16xf32>
    %c93 = arith.constant 93 : index
    %498 = memref.load %arg1[%c93] : memref<98xf32, #tpu.memory_space<smem>>
    %499 = vector.broadcast %498 : f32 to vector<2x16x16xf32>
    %500 = arith.mulf %499, %497 : vector<2x16x16xf32>
    %501 = arith.addf %496, %500 : vector<2x16x16xf32>
    %c0_301 = arith.constant 0 : index
    %c6_302 = arith.constant 6 : index
    %c3_303 = arith.constant 3 : index
    %502 = vector.load %arg5[%c0_301, %c6_302, %c3_303] : memref<2x22x22xf32, #tpu.memory_space<vmem>>, vector<2x16x16xf32>
    %c94 = arith.constant 94 : index
    %503 = memref.load %arg1[%c94] : memref<98xf32, #tpu.memory_space<smem>>
    %504 = vector.broadcast %503 : f32 to vector<2x16x16xf32>
    %505 = arith.mulf %504, %502 : vector<2x16x16xf32>
    %506 = arith.addf %501, %505 : vector<2x16x16xf32>
    %c0_304 = arith.constant 0 : index
    %c6_305 = arith.constant 6 : index
    %c4_306 = arith.constant 4 : index
    %507 = vector.load %arg5[%c0_304, %c6_305, %c4_306] : memref<2x22x22xf32, #tpu.memory_space<vmem>>, vector<2x16x16xf32>
    %c95 = arith.constant 95 : index
    %508 = memref.load %arg1[%c95] : memref<98xf32, #tpu.memory_space<smem>>
    %509 = vector.broadcast %508 : f32 to vector<2x16x16xf32>
    %510 = arith.mulf %509, %507 : vector<2x16x16xf32>
    %511 = arith.addf %506, %510 : vector<2x16x16xf32>
    %c0_307 = arith.constant 0 : index
    %c6_308 = arith.constant 6 : index
    %c5_309 = arith.constant 5 : index
    %512 = vector.load %arg5[%c0_307, %c6_308, %c5_309] : memref<2x22x22xf32, #tpu.memory_space<vmem>>, vector<2x16x16xf32>
    %c96 = arith.constant 96 : index
    %513 = memref.load %arg1[%c96] : memref<98xf32, #tpu.memory_space<smem>>
    %514 = vector.broadcast %513 : f32 to vector<2x16x16xf32>
    %515 = arith.mulf %514, %512 : vector<2x16x16xf32>
    %516 = arith.addf %511, %515 : vector<2x16x16xf32>
    %c0_310 = arith.constant 0 : index
    %c6_311 = arith.constant 6 : index
    %c6_312 = arith.constant 6 : index
    %517 = vector.load %arg5[%c0_310, %c6_311, %c6_312] : memref<2x22x22xf32, #tpu.memory_space<vmem>>, vector<2x16x16xf32>
    %c97 = arith.constant 97 : index
    %518 = memref.load %arg1[%c97] : memref<98xf32, #tpu.memory_space<smem>>
    %519 = vector.broadcast %518 : f32 to vector<2x16x16xf32>
    %520 = arith.mulf %519, %517 : vector<2x16x16xf32>
    %521 = arith.addf %516, %520 : vector<2x16x16xf32>
    %c0_313 = arith.constant 0 : index
    %522 = memref.load %arg2[%c0_313] : memref<1xf32, #tpu.memory_space<smem>>
    %523 = vector.broadcast %522 : f32 to vector<2x16x16xf32>
    %524 = arith.addf %521, %523 : vector<2x16x16xf32>
    %525 = vector.shape_cast %524 : vector<2x16x16xf32> to vector<2x1x16x16xf32>
    %526 = vector.broadcast %525 : vector<2x1x16x16xf32> to vector<2x4x16x16xf32>
    %527 = arith.mulf %0, %526 : vector<2x4x16x16xf32>
    %c0_314 = arith.constant 0 : index
    %c0_315 = arith.constant 0 : index
    %c0_316 = arith.constant 0 : index
    %c0_317 = arith.constant 0 : index
    %528 = vector.load %arg3[%c0_314, %c0_315, %c0_316, %c0_317] : memref<2x4x16x16xf32, #tpu.memory_space<vmem>>, vector<2x4x16x16xf32>
    tpu.vector_store %arg3[%c0_314, %c0_315, %c0_316, %c0_317], %527 {strides = array<i32>} : memref<2x4x16x16xf32, #tpu.memory_space<vmem>>, vector<2x4x16x16xf32>,
    return
  }
}

</mosaic_0001>

<llo_original>
// kernel: tpu_custom_call.1
$region0: #{tpu_custom_call.1}
  #allocation0 [shape = 'u32[]', space=smem, size = 0x4, offset = 0x4, fixed_abs, tag = 'smem constant byte address 0x4 - core index']
  #allocation1 [shape = 'u32[72,128]{1,0:T(1,128)}', space=vmem, size = 0x9000, scoped, tag = 'internal scratch']
  #allocation2 [shape = 'f32[2,22,22]{2,1,0:T(8,128)}', space=vmem, size = 0x6000, scoped, tag = 'scratch operand']
  #allocation3 [shape = 'f32[2,22,22]{2,1,0:T(8,128)}', space=vmem, size = 0x6000, scoped, tag = 'scratch operand']
  #allocation4 [shape = 'f32[1]{0:T(128)S(6)}', space=smem, size = 0x200, scoped, tag = 'scoped memory for tpu_custom_call.1']
  %s0 = inlined_call_operand.hbm [shape: f32[2,4,16,16], index: 0, kind: input, shape index: {}]
  %s1 = inlined_call_operand.vmem [shape: f32[98], index: 1, kind: input, shape index: {}]
  %s2 = inlined_call_operand.<no memory space> [shape: f32[1], index: 2, kind: input, shape index: {}]
  %s3 = inlined_call_operand.hbm [shape: f32[2,4,16,16], index: 3, kind: output, shape index: {}]
  %s4 = sld [smem:[#allocation0]]
  $region30: #{tpu_custom_call.1} parent=0
    _
  %s6 = ssub.s32 1, %s4
  %s7 = scalar_select 0, %s6, %s4
  %8 = sst [smem:[#allocation4]] %s2
  $region1: #{tpu_custom_call.1} parent=0
    #allocation5 [shape = 'u8[65536]{0}', space=vmem, size = 0x10000, scoped, tag = 'input window, operand 0, single buffered']
    #allocation6 [shape = 's32[1]{0}', space=sflag, size = 0x4, scoped, tag = 'scoped memory for tpu_custom_call.1']
    #allocation7 [shape = 's32[1]{0}', space=sflag, size = 0x4, scoped, tag = 'scoped memory for tpu_custom_call.1']
    #allocation8 [shape = 's32[1]{0}', space=sflag, size = 0x4, scoped, tag = 'scoped memory for tpu_custom_call.1']
    #allocation9 [shape = 'u8[512]{0}', space=smem, size = 0x200, scoped, tag = 'input window, operand 1, single buffered']
    #allocation10 [shape = 'u8[65536]{0}', space=vmem, size = 0x10000, scoped, tag = 'output window, operand 0, single buffered']
    %9 = vsyncpa [#allocation6], 0
    %10 = vsyncpa [#allocation8], 0
    %11 = vsyncpa [#allocation7], 0
    // Predicated region
    $region2: #{tpu_custom_call.1} parent=1 // pred_check
      _
    $region3: #{tpu_custom_call.1} parent=1 // pred_check_branch
      %13 = sbr.rel (0) target = $region5
    $region4: #{tpu_custom_call.1} parent=1 // pred_region
      %15 = vsyncadd [#allocation6], 0
      %s16 = sshll.u32 %s0, 4
      %s17 = int_to_ptr.hbm [resolvable:$true] %s16
      %s18 = sshll.u32 [#allocation5], 4
      %s19 = int_to_ptr.vmem [resolvable:$true] %s18
      %24 = dma.hbm_to_vmem [thread:$0]  %s17, 2048, %s19, [#allocation6], 128, 128, 8
    $region5: #{tpu_custom_call.1} parent=1 // pred_fallthru
      _
    // Predicated region
    $region6: #{tpu_custom_call.1} parent=1 // pred_check
      _
    $region7: #{tpu_custom_call.1} parent=1 // pred_check_branch
      %26 = sbr.rel (0) target = $region9
    $region8: #{tpu_custom_call.1} parent=1 // pred_region
      %28 = vsyncadd [#allocation8], 0
      %s30 = sshll.u32 %s1, 4
      %s31 = int_to_ptr.vmem [resolvable:$true] %s30
      %33 = dma.vmem_to_smem %s31, 16, [#allocation9], [#allocation8]
    $region9: #{tpu_custom_call.1} parent=1 // pred_fallthru
      _
    // Predicated region
    $region10: #{tpu_custom_call.1} parent=1 // pred_check
      _
    $region11: #{tpu_custom_call.1} parent=1 // pred_check_branch
      %35 = sbr.rel (0) target = $region13
    $region12: #{tpu_custom_call.1} parent=1 // pred_region
      _
    $region13: #{tpu_custom_call.1} parent=1 // pred_fallthru
      _
    // Predicated region
    $region14: #{tpu_custom_call.1} parent=1 // pred_check
      _
    $region15: #{tpu_custom_call.1} parent=1 // pred_check_branch
      %37 = sbr.rel (0) target = $region17
    $region16: #{tpu_custom_call.1} parent=1 // pred_region
      %39 = dma.done [#allocation6], 2048
    $region17: #{tpu_custom_call.1} parent=1 // pred_fallthru
      _
    // Predicated region
    $region18: #{tpu_custom_call.1} parent=1 // pred_check
      _
    $region19: #{tpu_custom_call.1} parent=1 // pred_check_branch
      %41 = sbr.rel (0) target = $region21
    $region20: #{tpu_custom_call.1} parent=1 // pred_region
      %43 = dma.done [#allocation8], 16
    $region21: #{tpu_custom_call.1} parent=1 // pred_fallthru
      _
    %44 = sfence
    %v45 = vld [vmem:[#allocation5] sm:$0xff]
    %v46 = vld [vmem:[#allocation5 + $0x8] sm:$0xff]
    %v47 = vld [vmem:[#allocation5 + $0x10] sm:$0xff]
    %v48 = vld [vmem:[#allocation5 + $0x18] sm:$0xff]
    %v49 = vld [vmem:[#allocation5 + $0x20] sm:$0xff]
    %v50 = vld [vmem:[#allocation5 + $0x28] sm:$0xff]
    %v51 = vld [vmem:[#allocation5 + $0x30] sm:$0xff]
    %v52 = vld [vmem:[#allocation5 + $0x38] sm:$0xff]
    %v53 = vld [vmem:[#allocation5 + $0x40] sm:$0xff]
    %v54 = vld [vmem:[#allocation5 + $0x48] sm:$0xff]
    %v55 = vld [vmem:[#allocation5 + $0x50] sm:$0xff]
    %v56 = vld [vmem:[#allocation5 + $0x58] sm:$0xff]
    %v57 = vld [vmem:[#allocation5 + $0x60] sm:$0xff]
    %v58 = vld [vmem:[#allocation5 + $0x68] sm:$0xff]
    %v59 = vld [vmem:[#allocation5 + $0x70] sm:$0xff]
    %v60 = vld [vmem:[#allocation5 + $0x78] sm:$0xff]
    %v61 = vmax.f32 %v45, %v47
    %v62 = vmax.f32 %v46, %v48
    %v63 = vmax.f32 %v53, %v55
    %v64 = vmax.f32 %v54, %v56
    %v65 = vadd.f32 %v45, %v47
    %v66 = vadd.f32 %v46, %v48
    %v67 = vadd.f32 %v53, %v55
    %v68 = vadd.f32 %v54, %v56
    %v69 = vmax.f32 %v61, %v49
    %v70 = vmax.f32 %v62, %v50
    %v71 = vmax.f32 %v63, %v57
    %v72 = vmax.f32 %v64, %v58
    %v73 = vadd.f32 %v65, %v49
    %v74 = vadd.f32 %v66, %v50
    %v75 = vadd.f32 %v67, %v57
    %v76 = vadd.f32 %v68, %v58
    %v77 = vmax.f32 %v69, %v51
    %v78 = vmax.f32 %v70, %v52
    %v79 = vmax.f32 %v71, %v59
    %v80 = vmax.f32 %v72, %v60
    %v81 = vadd.f32 %v73, %v51
    %v82 = vadd.f32 %v74, %v52
    %v83 = vadd.f32 %v75, %v59
    %v84 = vadd.f32 %v76, %v60
    %v85 = vmul.f32 %v81, 0.25
    %v86 = vmul.f32 %v82, 0.25
    %v87 = vmul.f32 %v83, 0.25
    %v88 = vmul.f32 %v84, 0.25
    %vm89 = vcmask 179200
    %90 = vst.msk [vmem:[#allocation2] sm:$0xff] %vm89, 0.0
    %91 = vst.msk [vmem:[#allocation2 + $0x8] sm:$0xff] %vm89, 0.0
    %vm92 = vcmask 177152
    %93 = vst.msk [vmem:[#allocation2 + $0x10] sm:$0x3f] %vm92, 0.0
    %94 = vst.msk [vmem:[#allocation2 + $0x18] sm:$0xff] %vm89, 0.0
    %95 = vst.msk [vmem:[#allocation2 + $0x20] sm:$0xff] %vm89, 0.0
    %96 = vst.msk [vmem:[#allocation2 + $0x28] sm:$0x3f] %vm92, 0.0
    %97 = vst.msk [vmem:[#allocation3] sm:$0xff] %vm89, 0.0
    %98 = vst.msk [vmem:[#allocation3 + $0x8] sm:$0xff] %vm89, 0.0
    %99 = vst.msk [vmem:[#allocation3 + $0x10] sm:$0x3f] %vm92, 0.0
    %100 = vst.msk [vmem:[#allocation3 + $0x18] sm:$0xff] %vm89, 0.0
    %101 = vst.msk [vmem:[#allocation3 + $0x20] sm:$0xff] %vm89, 0.0
    %102 = vst.msk [vmem:[#allocation3 + $0x28] sm:$0x3f] %vm92, 0.0
    %107 = vrot.lane.b32.xlu0 %v77, 3
    %v108 = vpop.permute.xlu0 %107
    %109 = vrot.lane.b32.xlu0 %v78, 3
    %v110 = vpop.permute.xlu0 %109
    %111 = vrot.lane.b32.xlu0 %v79, 3
    %v112 = vpop.permute.xlu0 %111
    %113 = vrot.lane.b32.xlu0 %v80, 3
    %v114 = vpop.permute.xlu0 %113
    %vm119 = vcmask 154648
    %120 = vst.msk [vmem:[#allocation2 + $0x3] sm:$0xff] %vm119, %v108
    %121 = vst.msk [vmem:[#allocation2 + $0xb] sm:$0xff] %vm119, %v110
    %122 = vst.msk [vmem:[#allocation2 + $0x1b] sm:$0xff] %vm119, %v112
    %123 = vst.msk [vmem:[#allocation2 + $0x23] sm:$0xff] %vm119, %v114
    %128 = vrot.lane.b32.xlu0 %v85, 3
    %v129 = vpop.permute.xlu0 %128
    %130 = vrot.lane.b32.xlu0 %v86, 3
    %v131 = vpop.permute.xlu0 %130
    %132 = vrot.lane.b32.xlu0 %v87, 3
    %v133 = vpop.permute.xlu0 %132
    %134 = vrot.lane.b32.xlu0 %v88, 3
    %v135 = vpop.permute.xlu0 %134
    %140 = vst.msk [vmem:[#allocation3 + $0x3] sm:$0xff] %vm119, %v129
    %141 = vst.msk [vmem:[#allocation3 + $0xb] sm:$0xff] %vm119, %v131
    %142 = vst.msk [vmem:[#allocation3 + $0x1b] sm:$0xff] %vm119, %v133
    %143 = vst.msk [vmem:[#allocation3 + $0x23] sm:$0xff] %vm119, %v135
    %v144 = vld [vmem:[#allocation2] sm:$0xff]
    %v145 = vld [vmem:[#allocation2 + $0x8] sm:$0xff]
    %v146 = vld [vmem:[#allocation2 + $0x18] sm:$0xff]
    %v147 = vld [vmem:[#allocation2 + $0x20] sm:$0xff]
    %s148 = sld [smem:[#allocation9]]
    %v149 = vstv %s148
    %v150 = vmul.f32 %v149, %v144
    %v151 = vmul.f32 %v149, %v145
    %v152 = vmul.f32 %v149, %v146
    %v153 = vmul.f32 %v149, %v147
    %v154 = vadd.f32 %v150, 0.0
    %v155 = vadd.f32 %v151, 0.0
    %v156 = vadd.f32 %v152, 0.0
    %v157 = vadd.f32 %v153, 0.0
    %s158 = sld [smem:[#allocation9 + $0x1]]
    %v159 = vstv %s158
    %v160 = vmul.f32 %v159, %v144
    %v161 = vmul.f32 %v159, %v145
    %v162 = vmul.f32 %v159, %v146
    %v163 = vmul.f32 %v159, %v147
    %168 = vrot.lane.b32.xlu0 %v160, 127
    %v169 = vpop.permute.xlu0 %168
    %170 = vrot.lane.b32.xlu0 %v161, 127
    %v171 = vpop.permute.xlu0 %170
    %172 = vrot.lane.b32.xlu0 %v162, 127
    %v173 = vpop.permute.xlu0 %172
    %174 = vrot.lane.b32.xlu0 %v163, 127
    %v175 = vpop.permute.xlu0 %174
    %v180 = vadd.f32 %v154, %v169
    %v181 = vadd.f32 %v155, %v171
    %v182 = vadd.f32 %v156, %v173
    %v183 = vadd.f32 %v157, %v175
    %s184 = sld [smem:[#allocation9 + $0x2]]
    %v185 = vstv %s184
    %v186 = vmul.f32 %v185, %v144
    %v187 = vmul.f32 %v185, %v145
    %v188 = vmul.f32 %v185, %v146
    %v189 = vmul.f32 %v185, %v147
    %194 = vrot.lane.b32.xlu0 %v186, 126
    %v195 = vpop.permute.xlu0 %194
    %196 = vrot.lane.b32.xlu0 %v187, 126
    %v197 = vpop.permute.xlu0 %196
    %198 = vrot.lane.b32.xlu0 %v188, 126
    %v199 = vpop.permute.xlu0 %198
    %200 = vrot.lane.b32.xlu0 %v189, 126
    %v201 = vpop.permute.xlu0 %200
    %v206 = vadd.f32 %v180, %v195
    %v207 = vadd.f32 %v181, %v197
    %v208 = vadd.f32 %v182, %v199
    %v209 = vadd.f32 %v183, %v201
    %s210 = sld [smem:[#allocation9 + $0x3]]
    %v211 = vstv %s210
    %v212 = vmul.f32 %v211, %v144
    %v213 = vmul.f32 %v211, %v145
    %v214 = vmul.f32 %v211, %v146
    %v215 = vmul.f32 %v211, %v147
    %220 = vrot.lane.b32.xlu0 %v212, 125
    %v221 = vpop.permute.xlu0 %220
    %222 = vrot.lane.b32.xlu0 %v213, 125
    %v223 = vpop.permute.xlu0 %222
    %224 = vrot.lane.b32.xlu0 %v214, 125
    %v225 = vpop.permute.xlu0 %224
    %226 = vrot.lane.b32.xlu0 %v215, 125
    %v227 = vpop.permute.xlu0 %226
    %v232 = vadd.f32 %v206, %v221
    %v233 = vadd.f32 %v207, %v223
    %v234 = vadd.f32 %v208, %v225
    %v235 = vadd.f32 %v209, %v227
    %s236 = sld [smem:[#allocation9 + $0x4]]
    %v237 = vstv %s236
    %v238 = vmul.f32 %v237, %v144
    %v239 = vmul.f32 %v237, %v145
    %v240 = vmul.f32 %v237, %v146
    %v241 = vmul.f32 %v237, %v147
    %246 = vrot.lane.b32.xlu0 %v238, 124
    %v247 = vpop.permute.xlu0 %246
    %248 = vrot.lane.b32.xlu0 %v239, 124
    %v249 = vpop.permute.xlu0 %248
    %250 = vrot.lane.b32.xlu0 %v240, 124
    %v251 = vpop.permute.xlu0 %250
    %252 = vrot.lane.b32.xlu0 %v241, 124
    %v253 = vpop.permute.xlu0 %252
    %v258 = vadd.f32 %v232, %v247
    %v259 = vadd.f32 %v233, %v249
    %v260 = vadd.f32 %v234, %v251
    %v261 = vadd.f32 %v235, %v253
    %s262 = sld [smem:[#allocation9 + $0x5]]
    %v263 = vstv %s262
    %v264 = vmul.f32 %v263, %v144
    %v265 = vmul.f32 %v263, %v145
    %v266 = vmul.f32 %v263, %v146
    %v267 = vmul.f32 %v263, %v147
    %272 = vrot.lane.b32.xlu0 %v264, 123
    %v273 = vpop.permute.xlu0 %272
    %274 = vrot.lane.b32.xlu0 %v265, 123
    %v275 = vpop.permute.xlu0 %274
    %276 = vrot.lane.b32.xlu0 %v266, 123
    %v277 = vpop.permute.xlu0 %276
    %278 = vrot.lane.b32.xlu0 %v267, 123
    %v279 = vpop.permute.xlu0 %278
    %v284 = vadd.f32 %v258, %v273
    %v285 = vadd.f32 %v259, %v275
    %v286 = vadd.f32 %v260, %v277
    %v287 = vadd.f32 %v261, %v279
    %s288 = sld [smem:[#allocation9 + $0x6]]
    %v289 = vstv %s288
    %v290 = vmul.f32 %v289, %v144
    %v291 = vmul.f32 %v289, %v145
    %v292 = vmul.f32 %v289, %v146
    %v293 = vmul.f32 %v289, %v147
    %298 = vrot.lane.b32.xlu0 %v290, 122
    %v299 = vpop.permute.xlu0 %298
    %300 = vrot.lane.b32.xlu0 %v291, 122
    %v301 = vpop.permute.xlu0 %300
    %302 = vrot.lane.b32.xlu0 %v292, 122
    %v303 = vpop.permute.xlu0 %302
    %304 = vrot.lane.b32.xlu0 %v293, 122
    %v305 = vpop.permute.xlu0 %304
    %v310 = vadd.f32 %v284, %v299
    %v311 = vadd.f32 %v285, %v301
    %v312 = vadd.f32 %v286, %v303
    %v313 = vadd.f32 %v287, %v305
    %v314 = vld [vmem:[#allocation2 + $0x1] sm:$0xff]
    %v315 = vld [vmem:[#allocation2 + $0x9] sm:$0xff]
    %v316 = vld [vmem:[#allocation2 + $0x19] sm:$0xff]
    %v317 = vld [vmem:[#allocation2 + $0x21] sm:$0xff]
    %s318 = sld [smem:[#allocation9 + $0x7]]
    %v319 = vstv %s318
    %v320 = vmul.f32 %v319, %v314
    %v321 = vmul.f32 %v319, %v315
    %v322 = vmul.f32 %v319, %v316
    %v323 = vmul.f32 %v319, %v317
    %v324 = vadd.f32 %v310, %v320
    %v325 = vadd.f32 %v311, %v321
    %v326 = vadd.f32 %v312, %v322
    %v327 = vadd.f32 %v313, %v323
    %s328 = sld [smem:[#allocation9 + $0x8]]
    %v329 = vstv %s328
    %v330 = vmul.f32 %v329, %v314
    %v331 = vmul.f32 %v329, %v315
    %v332 = vmul.f32 %v329, %v316
    %v333 = vmul.f32 %v329, %v317
    %338 = vrot.lane.b32.xlu0 %v330, 127
    %v339 = vpop.permute.xlu0 %338
    %340 = vrot.lane.b32.xlu0 %v331, 127
    %v341 = vpop.permute.xlu0 %340
    %342 = vrot.lane.b32.xlu0 %v332, 127
    %v343 = vpop.permute.xlu0 %342
    %344 = vrot.lane.b32.xlu0 %v333, 127
    %v345 = vpop.permute.xlu0 %344
    %v350 = vadd.f32 %v324, %v339
    %v351 = vadd.f32 %v325, %v341
    %v352 = vadd.f32 %v326, %v343
    %v353 = vadd.f32 %v327, %v345
    %s354 = sld [smem:[#allocation9 + $0x9]]
    %v355 = vstv %s354
    %v356 = vmul.f32 %v355, %v314
    %v357 = vmul.f32 %v355, %v315
    %v358 = vmul.f32 %v355, %v316
    %v359 = vmul.f32 %v355, %v317
    %364 = vrot.lane.b32.xlu0 %v356, 126
    %v365 = vpop.permute.xlu0 %364
    %366 = vrot.lane.b32.xlu0 %v357, 126
    %v367 = vpop.permute.xlu0 %366
    %368 = vrot.lane.b32.xlu0 %v358, 126
    %v369 = vpop.permute.xlu0 %368
    %370 = vrot.lane.b32.xlu0 %v359, 126
    %v371 = vpop.permute.xlu0 %370
    %v376 = vadd.f32 %v350, %v365
    %v377 = vadd.f32 %v351, %v367
    %v378 = vadd.f32 %v352, %v369
    %v379 = vadd.f32 %v353, %v371
    %s380 = sld [smem:[#allocation9 + $0xa]]
    %v381 = vstv %s380
    %v382 = vmul.f32 %v381, %v314
    %v383 = vmul.f32 %v381, %v315
    %v384 = vmul.f32 %v381, %v316
    %v385 = vmul.f32 %v381, %v317
    %390 = vrot.lane.b32.xlu0 %v382, 125
    %v391 = vpop.permute.xlu0 %390
    %392 = vrot.lane.b32.xlu0 %v383, 125
    %v393 = vpop.permute.xlu0 %392
    %394 = vrot.lane.b32.xlu0 %v384, 125
    %v395 = vpop.permute.xlu0 %394
    %396 = vrot.lane.b32.xlu0 %v385, 125
    %v397 = vpop.permute.xlu0 %396
    %v402 = vadd.f32 %v376, %v391
    %v403 = vadd.f32 %v377, %v393
    %v404 = vadd.f32 %v378, %v395
    %v405 = vadd.f32 %v379, %v397
    %s406 = sld [smem:[#allocation9 + $0xb]]
    %v407 = vstv %s406
    %v408 = vmul.f32 %v407, %v314
    %v409 = vmul.f32 %v407, %v315
    %v410 = vmul.f32 %v407, %v316
    %v411 = vmul.f32 %v407, %v317
    %416 = vrot.lane.b32.xlu0 %v408, 124
    %v417 = vpop.permute.xlu0 %416
    %418 = vrot.lane.b32.xlu0 %v409, 124
    %v419 = vpop.permute.xlu0 %418
    %420 = vrot.lane.b32.xlu0 %v410, 124
    %v421 = vpop.permute.xlu0 %420
    %422 = vrot.lane.b32.xlu0 %v411, 124
    %v423 = vpop.permute.xlu0 %422
    %v428 = vadd.f32 %v402, %v417
    %v429 = vadd.f32 %v403, %v419
    %v430 = vadd.f32 %v404, %v421
    %v431 = vadd.f32 %v405, %v423
    %s432 = sld [smem:[#allocation9 + $0xc]]
    %v433 = vstv %s432
    %v434 = vmul.f32 %v433, %v314
    %v435 = vmul.f32 %v433, %v315
    %v436 = vmul.f32 %v433, %v316
    %v437 = vmul.f32 %v433, %v317
    %442 = vrot.lane.b32.xlu0 %v434, 123
    %v443 = vpop.permute.xlu0 %442
    %444 = vrot.lane.b32.xlu0 %v435, 123
    %v445 = vpop.permute.xlu0 %444
    %446 = vrot.lane.b32.xlu0 %v436, 123
    %v447 = vpop.permute.xlu0 %446
    %448 = vrot.lane.b32.xlu0 %v437, 123
    %v449 = vpop.permute.xlu0 %448
    %v454 = vadd.f32 %v428, %v443
    %v455 = vadd.f32 %v429, %v445
    %v456 = vadd.f32 %v430, %v447
    %v457 = vadd.f32 %v431, %v449
    %s458 = sld [smem:[#allocation9 + $0xd]]
    %v459 = vstv %s458
    %v460 = vmul.f32 %v459, %v314
    %v461 = vmul.f32 %v459, %v315
    %v462 = vmul.f32 %v459, %v316
    %v463 = vmul.f32 %v459, %v317
    %468 = vrot.lane.b32.xlu0 %v460, 122
    %v469 = vpop.permute.xlu0 %468
    %470 = vrot.lane.b32.xlu0 %v461, 122
    %v471 = vpop.permute.xlu0 %470
    %472 = vrot.lane.b32.xlu0 %v462, 122
    %v473 = vpop.permute.xlu0 %472
    %474 = vrot.lane.b32.xlu0 %v463, 122
    %v475 = vpop.permute.xlu0 %474
    %v480 = vadd.f32 %v454, %v469
    %v481 = vadd.f32 %v455, %v471
    %v482 = vadd.f32 %v456, %v473
    %v483 = vadd.f32 %v457, %v475
    %v484 = vld [vmem:[#allocation2 + $0x2] sm:$0xff]
    %v485 = vld [vmem:[#allocation2 + $0xa] sm:$0xff]
    %v486 = vld [vmem:[#allocation2 + $0x1a] sm:$0xff]
    %v487 = vld [vmem:[#allocation2 + $0x22] sm:$0xff]
    %s488 = sld [smem:[#allocation9 + $0xe]]
    %v489 = vstv %s488
    %v490 = vmul.f32 %v489, %v484
    %v491 = vmul.f32 %v489, %v485
    %v492 = vmul.f32 %v489, %v486
    %v493 = vmul.f32 %v489, %v487
    %v494 = vadd.f32 %v480, %v490
    %v495 = vadd.f32 %v481, %v491
    %v496 = vadd.f32 %v482, %v492
    %v497 = vadd.f32 %v483, %v493
    %s498 = sld [smem:[#allocation9 + $0xf]]
    %v499 = vstv %s498
    %v500 = vmul.f32 %v499, %v484
    %v501 = vmul.f32 %v499, %v485
    %v502 = vmul.f32 %v499, %v486
    %v503 = vmul.f32 %v499, %v487
    %508 = vrot.lane.b32.xlu0 %v500, 127
    %v509 = vpop.permute.xlu0 %508
    %510 = vrot.lane.b32.xlu0 %v501, 127
    %v511 = vpop.permute.xlu0 %510
    %512 = vrot.lane.b32.xlu0 %v502, 127
    %v513 = vpop.permute.xlu0 %512
    %514 = vrot.lane.b32.xlu0 %v503, 127
    %v515 = vpop.permute.xlu0 %514
    %v520 = vadd.f32 %v494, %v509
    %v521 = vadd.f32 %v495, %v511
    %v522 = vadd.f32 %v496, %v513
    %v523 = vadd.f32 %v497, %v515
    %s524 = sld [smem:[#allocation9 + $0x10]]
    %v525 = vstv %s524
    %v526 = vmul.f32 %v525, %v484
    %v527 = vmul.f32 %v525, %v485
    %v528 = vmul.f32 %v525, %v486
    %v529 = vmul.f32 %v525, %v487
    %534 = vrot.lane.b32.xlu0 %v526, 126
    %v535 = vpop.permute.xlu0 %534
    %536 = vrot.lane.b32.xlu0 %v527, 126
    %v537 = vpop.permute.xlu0 %536
    %538 = vrot.lane.b32.xlu0 %v528, 126
    %v539 = vpop.permute.xlu0 %538
    %540 = vrot.lane.b32.xlu0 %v529, 126
    %v541 = vpop.permute.xlu0 %540
    %v546 = vadd.f32 %v520, %v535
    %v547 = vadd.f32 %v521, %v537
    %v548 = vadd.f32 %v522, %v539
    %v549 = vadd.f32 %v523, %v541
    %s550 = sld [smem:[#allocation9 + $0x11]]
    %v551 = vstv %s550
    %v552 = vmul.f32 %v551, %v484
    %v553 = vmul.f32 %v551, %v485
    %v554 = vmul.f32 %v551, %v486
    %v555 = vmul.f32 %v551, %v487
    %560 = vrot.lane.b32.xlu0 %v552, 125
    %v561 = vpop.permute.xlu0 %560
    %562 = vrot.lane.b32.xlu0 %v553, 125
    %v563 = vpop.permute.xlu0 %562
    %564 = vrot.lane.b32.xlu0 %v554, 125
    %v565 = vpop.permute.xlu0 %564
    %566 = vrot.lane.b32.xlu0 %v555, 125
    %v567 = vpop.permute.xlu0 %566
    %v572 = vadd.f32 %v546, %v561
    %v573 = vadd.f32 %v547, %v563
    %v574 = vadd.f32 %v548, %v565
    %v575 = vadd.f32 %v549, %v567
    %s576 = sld [smem:[#allocation9 + $0x12]]
    %v577 = vstv %s576
    %v578 = vmul.f32 %v577, %v484
    %v579 = vmul.f32 %v577, %v485
    %v580 = vmul.f32 %v577, %v486
    %v581 = vmul.f32 %v577, %v487
    %586 = vrot.lane.b32.xlu0 %v578, 124
    %v587 = vpop.permute.xlu0 %586
    %588 = vrot.lane.b32.xlu0 %v579, 124
    %v589 = vpop.permute.xlu0 %588
    %590 = vrot.lane.b32.xlu0 %v580, 124
    %v591 = vpop.permute.xlu0 %590
    %592 = vrot.lane.b32.xlu0 %v581, 124
    %v593 = vpop.permute.xlu0 %592
    %v598 = vadd.f32 %v572, %v587
    %v599 = vadd.f32 %v573, %v589
    %v600 = vadd.f32 %v574, %v591
    %v601 = vadd.f32 %v575, %v593
    %s602 = sld [smem:[#allocation9 + $0x13]]
    %v603 = vstv %s602
    %v604 = vmul.f32 %v603, %v484
    %v605 = vmul.f32 %v603, %v485
    %v606 = vmul.f32 %v603, %v486
    %v607 = vmul.f32 %v603, %v487
    %612 = vrot.lane.b32.xlu0 %v604, 123
    %v613 = vpop.permute.xlu0 %612
    %614 = vrot.lane.b32.xlu0 %v605, 123
    %v615 = vpop.permute.xlu0 %614
    %616 = vrot.lane.b32.xlu0 %v606, 123
    %v617 = vpop.permute.xlu0 %616
    %618 = vrot.lane.b32.xlu0 %v607, 123
    %v619 = vpop.permute.xlu0 %618
    %v624 = vadd.f32 %v598, %v613
    %v625 = vadd.f32 %v599, %v615
    %v626 = vadd.f32 %v600, %v617
    %v627 = vadd.f32 %v601, %v619
    %s628 = sld [smem:[#allocation9 + $0x14]]
    %v629 = vstv %s628
    %v630 = vmul.f32 %v629, %v484
    %v631 = vmul.f32 %v629, %v485
    %v632 = vmul.f32 %v629, %v486
    %v633 = vmul.f32 %v629, %v487
    %638 = vrot.lane.b32.xlu0 %v630, 122
    %v639 = vpop.permute.xlu0 %638
    %640 = vrot.lane.b32.xlu0 %v631, 122
    %v641 = vpop.permute.xlu0 %640
    %642 = vrot.lane.b32.xlu0 %v632, 122
    %v643 = vpop.permute.xlu0 %642
    %644 = vrot.lane.b32.xlu0 %v633, 122
    %v645 = vpop.permute.xlu0 %644
    %v650 = vadd.f32 %v624, %v639
    %v651 = vadd.f32 %v625, %v641
    %v652 = vadd.f32 %v626, %v643
    %v653 = vadd.f32 %v627, %v645
    %v654 = vld [vmem:[#allocation2 + $0x3] sm:$0xff]
    %v655 = vld [vmem:[#allocation2 + $0xb] sm:$0xff]
    %v656 = vld [vmem:[#allocation2 + $0x1b] sm:$0xff]
    %v657 = vld [vmem:[#allocation2 + $0x23] sm:$0xff]
    %s658 = sld [smem:[#allocation9 + $0x15]]
    %v659 = vstv %s658
    %v660 = vmul.f32 %v659, %v654
    %v661 = vmul.f32 %v659, %v655
    %v662 = vmul.f32 %v659, %v656
    %v663 = vmul.f32 %v659, %v657
    %v664 = vadd.f32 %v650, %v660
    %v665 = vadd.f32 %v651, %v661
    %v666 = vadd.f32 %v652, %v662
    %v667 = vadd.f32 %v653, %v663
    %s668 = sld [smem:[#allocation9 + $0x16]]
    %v669 = vstv %s668
    %v670 = vmul.f32 %v669, %v654
    %v671 = vmul.f32 %v669, %v655
    %v672 = vmul.f32 %v669, %v656
    %v673 = vmul.f32 %v669, %v657
    %678 = vrot.lane.b32.xlu0 %v670, 127
    %v679 = vpop.permute.xlu0 %678
    %680 = vrot.lane.b32.xlu0 %v671, 127
    %v681 = vpop.permute.xlu0 %680
    %682 = vrot.lane.b32.xlu0 %v672, 127
    %v683 = vpop.permute.xlu0 %682
    %684 = vrot.lane.b32.xlu0 %v673, 127
    %v685 = vpop.permute.xlu0 %684
    %v690 = vadd.f32 %v664, %v679
    %v691 = vadd.f32 %v665, %v681
    %v692 = vadd.f32 %v666, %v683
    %v693 = vadd.f32 %v667, %v685
    %s694 = sld [smem:[#allocation9 + $0x17]]
    %v695 = vstv %s694
    %v696 = vmul.f32 %v695, %v654
    %v697 = vmul.f32 %v695, %v655
    %v698 = vmul.f32 %v695, %v656
    %v699 = vmul.f32 %v695, %v657
    %704 = vrot.lane.b32.xlu0 %v696, 126
    %v705 = vpop.permute.xlu0 %704
    %706 = vrot.lane.b32.xlu0 %v697, 126
    %v707 = vpop.permute.xlu0 %706
    %708 = vrot.lane.b32.xlu0 %v698, 126
    %v709 = vpop.permute.xlu0 %708
    %710 = vrot.lane.b32.xlu0 %v699, 126
    %v711 = vpop.permute.xlu0 %710
    %v716 = vadd.f32 %v690, %v705
    %v717 = vadd.f32 %v691, %v707
    %v718 = vadd.f32 %v692, %v709
    %v719 = vadd.f32 %v693, %v711
    %s720 = sld [smem:[#allocation9 + $0x18]]
    %v721 = vstv %s720
    %v722 = vmul.f32 %v721, %v654
    %v723 = vmul.f32 %v721, %v655
    %v724 = vmul.f32 %v721, %v656
    %v725 = vmul.f32 %v721, %v657
    %730 = vrot.lane.b32.xlu0 %v722, 125
    %v731 = vpop.permute.xlu0 %730
    %732 = vrot.lane.b32.xlu0 %v723, 125
    %v733 = vpop.permute.xlu0 %732
    %734 = vrot.lane.b32.xlu0 %v724, 125
    %v735 = vpop.permute.xlu0 %734
    %736 = vrot.lane.b32.xlu0 %v725, 125
    %v737 = vpop.permute.xlu0 %736
    %v742 = vadd.f32 %v716, %v731
    %v743 = vadd.f32 %v717, %v733
    %v744 = vadd.f32 %v718, %v735
    %v745 = vadd.f32 %v719, %v737
    %s746 = sld [smem:[#allocation9 + $0x19]]
    %v747 = vstv %s746
    %v748 = vmul.f32 %v747, %v654
    %v749 = vmul.f32 %v747, %v655
    %v750 = vmul.f32 %v747, %v656
    %v751 = vmul.f32 %v747, %v657
    %756 = vrot.lane.b32.xlu0 %v748, 124
    %v757 = vpop.permute.xlu0 %756
    %758 = vrot.lane.b32.xlu0 %v749, 124
    %v759 = vpop.permute.xlu0 %758
    %760 = vrot.lane.b32.xlu0 %v750, 124
    %v761 = vpop.permute.xlu0 %760
    %762 = vrot.lane.b32.xlu0 %v751, 124
    %v763 = vpop.permute.xlu0 %762
    %v768 = vadd.f32 %v742, %v757
    %v769 = vadd.f32 %v743, %v759
    %v770 = vadd.f32 %v744, %v761
    %v771 = vadd.f32 %v745, %v763
    %s772 = sld [smem:[#allocation9 + $0x1a]]
    %v773 = vstv %s772
    %v774 = vmul.f32 %v773, %v654
    %v775 = vmul.f32 %v773, %v655
    %v776 = vmul.f32 %v773, %v656
    %v777 = vmul.f32 %v773, %v657
    %782 = vrot.lane.b32.xlu0 %v774, 123
    %v783 = vpop.permute.xlu0 %782
    %784 = vrot.lane.b32.xlu0 %v775, 123
    %v785 = vpop.permute.xlu0 %784
    %786 = vrot.lane.b32.xlu0 %v776, 123
    %v787 = vpop.permute.xlu0 %786
    %788 = vrot.lane.b32.xlu0 %v777, 123
    %v789 = vpop.permute.xlu0 %788
    %v794 = vadd.f32 %v768, %v783
    %v795 = vadd.f32 %v769, %v785
    %v796 = vadd.f32 %v770, %v787
    %v797 = vadd.f32 %v771, %v789
    %s798 = sld [smem:[#allocation9 + $0x1b]]
    %v799 = vstv %s798
    %v800 = vmul.f32 %v799, %v654
    %v801 = vmul.f32 %v799, %v655
    %v802 = vmul.f32 %v799, %v656
    %v803 = vmul.f32 %v799, %v657
    %808 = vrot.lane.b32.xlu0 %v800, 122
    %v809 = vpop.permute.xlu0 %808
    %810 = vrot.lane.b32.xlu0 %v801, 122
    %v811 = vpop.permute.xlu0 %810
    %812 = vrot.lane.b32.xlu0 %v802, 122
    %v813 = vpop.permute.xlu0 %812
    %814 = vrot.lane.b32.xlu0 %v803, 122
    %v815 = vpop.permute.xlu0 %814
    %v820 = vadd.f32 %v794, %v809
    %v821 = vadd.f32 %v795, %v811
    %v822 = vadd.f32 %v796, %v813
    %v823 = vadd.f32 %v797, %v815
    %v824 = vld [vmem:[#allocation2 + $0x4] sm:$0xff]
    %v825 = vld [vmem:[#allocation2 + $0xc] sm:$0xff]
    %v826 = vld [vmem:[#allocation2 + $0x1c] sm:$0xff]
    %v827 = vld [vmem:[#allocation2 + $0x24] sm:$0xff]
    %s828 = sld [smem:[#allocation9 + $0x1c]]
    %v829 = vstv %s828
    %v830 = vmul.f32 %v829, %v824
    %v831 = vmul.f32 %v829, %v825
    %v832 = vmul.f32 %v829, %v826
    %v833 = vmul.f32 %v829, %v827
    %v834 = vadd.f32 %v820, %v830
    %v835 = vadd.f32 %v821, %v831
    %v836 = vadd.f32 %v822, %v832
    %v837 = vadd.f32 %v823, %v833
    %s838 = sld [smem:[#allocation9 + $0x1d]]
    %v839 = vstv %s838
    %v840 = vmul.f32 %v839, %v824
    %v841 = vmul.f32 %v839, %v825
    %v842 = vmul.f32 %v839, %v826
    %v843 = vmul.f32 %v839, %v827
    %848 = vrot.lane.b32.xlu0 %v840, 127
    %v849 = vpop.permute.xlu0 %848
    %850 = vrot.lane.b32.xlu0 %v841, 127
    %v851 = vpop.permute.xlu0 %850
    %852 = vrot.lane.b32.xlu0 %v842, 127
    %v853 = vpop.permute.xlu0 %852
    %854 = vrot.lane.b32.xlu0 %v843, 127
    %v855 = vpop.permute.xlu0 %854
    %v860 = vadd.f32 %v834, %v849
    %v861 = vadd.f32 %v835, %v851
    %v862 = vadd.f32 %v836, %v853
    %v863 = vadd.f32 %v837, %v855
    %s864 = sld [smem:[#allocation9 + $0x1e]]
    %v865 = vstv %s864
    %v866 = vmul.f32 %v865, %v824
    %v867 = vmul.f32 %v865, %v825
    %v868 = vmul.f32 %v865, %v826
    %v869 = vmul.f32 %v865, %v827
    %874 = vrot.lane.b32.xlu0 %v866, 126
    %v875 = vpop.permute.xlu0 %874
    %876 = vrot.lane.b32.xlu0 %v867, 126
    %v877 = vpop.permute.xlu0 %876
    %878 = vrot.lane.b32.xlu0 %v868, 126
    %v879 = vpop.permute.xlu0 %878
    %880 = vrot.lane.b32.xlu0 %v869, 126
    %v881 = vpop.permute.xlu0 %880
    %v886 = vadd.f32 %v860, %v875
    %v887 = vadd.f32 %v861, %v877
    %v888 = vadd.f32 %v862, %v879
    %v889 = vadd.f32 %v863, %v881
    %s890 = sld [smem:[#allocation9 + $0x1f]]
    %v891 = vstv %s890
    %v892 = vmul.f32 %v891, %v824
    %v893 = vmul.f32 %v891, %v825
    %v894 = vmul.f32 %v891, %v826
    %v895 = vmul.f32 %v891, %v827
    %900 = vrot.lane.b32.xlu0 %v892, 125
    %v901 = vpop.permute.xlu0 %900
    %902 = vrot.lane.b32.xlu0 %v893, 125
    %v903 = vpop.permute.xlu0 %902
    %904 = vrot.lane.b32.xlu0 %v894, 125
    %v905 = vpop.permute.xlu0 %904
    %906 = vrot.lane.b32.xlu0 %v895, 125
    %v907 = vpop.permute.xlu0 %906
    %v912 = vadd.f32 %v886, %v901
    %v913 = vadd.f32 %v887, %v903
    %v914 = vadd.f32 %v888, %v905
    %v915 = vadd.f32 %v889, %v907
    %s916 = sld [smem:[#allocation9 + $0x20]]
    %v917 = vstv %s916
    %v918 = vmul.f32 %v917, %v824
    %v919 = vmul.f32 %v917, %v825
    %v920 = vmul.f32 %v917, %v826
    %v921 = vmul.f32 %v917, %v827
    %926 = vrot.lane.b32.xlu0 %v918, 124
    %v927 = vpop.permute.xlu0 %926
    %928 = vrot.lane.b32.xlu0 %v919, 124
    %v929 = vpop.permute.xlu0 %928
    %930 = vrot.lane.b32.xlu0 %v920, 124
    %v931 = vpop.permute.xlu0 %930
    %932 = vrot.lane.b32.xlu0 %v921, 124
    %v933 = vpop.permute.xlu0 %932
    %v938 = vadd.f32 %v912, %v927
    %v939 = vadd.f32 %v913, %v929
    %v940 = vadd.f32 %v914, %v931
    %v941 = vadd.f32 %v915, %v933
    %s942 = sld [smem:[#allocation9 + $0x21]]
    %v943 = vstv %s942
    %v944 = vmul.f32 %v943, %v824
    %v945 = vmul.f32 %v943, %v825
    %v946 = vmul.f32 %v943, %v826
    %v947 = vmul.f32 %v943, %v827
    %952 = vrot.lane.b32.xlu0 %v944, 123
    %v953 = vpop.permute.xlu0 %952
    %954 = vrot.lane.b32.xlu0 %v945, 123
    %v955 = vpop.permute.xlu0 %954
    %956 = vrot.lane.b32.xlu0 %v946, 123
    %v957 = vpop.permute.xlu0 %956
    %958 = vrot.lane.b32.xlu0 %v947, 123
    %v959 = vpop.permute.xlu0 %958
    %v964 = vadd.f32 %v938, %v953
    %v965 = vadd.f32 %v939, %v955
    %v966 = vadd.f32 %v940, %v957
    %v967 = vadd.f32 %v941, %v959
    %s968 = sld [smem:[#allocation9 + $0x22]]
    %v969 = vstv %s968
    %v970 = vmul.f32 %v969, %v824
    %v971 = vmul.f32 %v969, %v825
    %v972 = vmul.f32 %v969, %v826
    %v973 = vmul.f32 %v969, %v827
    %978 = vrot.lane.b32.xlu0 %v970, 122
    %v979 = vpop.permute.xlu0 %978
    %980 = vrot.lane.b32.xlu0 %v971, 122
    %v981 = vpop.permute.xlu0 %980
    %982 = vrot.lane.b32.xlu0 %v972, 122
    %v983 = vpop.permute.xlu0 %982
    %984 = vrot.lane.b32.xlu0 %v973, 122
    %v985 = vpop.permute.xlu0 %984
    %v990 = vadd.f32 %v964, %v979
    %v991 = vadd.f32 %v965, %v981
    %v992 = vadd.f32 %v966, %v983
    %v993 = vadd.f32 %v967, %v985
    %v994 = vld [vmem:[#allocation2 + $0x5] sm:$0xff]
    %v995 = vld [vmem:[#allocation2 + $0xd] sm:$0xff]
    %v996 = vld [vmem:[#allocation2 + $0x1d] sm:$0xff]
    %v997 = vld [vmem:[#allocation2 + $0x25] sm:$0xff]
    %s998 = sld [smem:[#allocation9 + $0x23]]
    %v999 = vstv %s998
    %v1000 = vmul.f32 %v999, %v994
    %v1001 = vmul.f32 %v999, %v995
    %v1002 = vmul.f32 %v999, %v996
    %v1003 = vmul.f32 %v999, %v997
    %v1004 = vadd.f32 %v990, %v1000
    %v1005 = vadd.f32 %v991, %v1001
    %v1006 = vadd.f32 %v992, %v1002
    %v1007 = vadd.f32 %v993, %v1003
    %s1008 = sld [smem:[#allocation9 + $0x24]]
    %v1009 = vstv %s1008
    %v1010 = vmul.f32 %v1009, %v994
    %v1011 = vmul.f32 %v1009, %v995
    %v1012 = vmul.f32 %v1009, %v996
    %v1013 = vmul.f32 %v1009, %v997
    %1018 = vrot.lane.b32.xlu0 %v1010, 127
    %v1019 = vpop.permute.xlu0 %1018
    %1020 = vrot.lane.b32.xlu0 %v1011, 127
    %v1021 = vpop.permute.xlu0 %1020
    %1022 = vrot.lane.b32.xlu0 %v1012, 127
    %v1023 = vpop.permute.xlu0 %1022
    %1024 = vrot.lane.b32.xlu0 %v1013, 127
    %v1025 = vpop.permute.xlu0 %1024
    %v1030 = vadd.f32 %v1004, %v1019
    %v1031 = vadd.f32 %v1005, %v1021
    %v1032 = vadd.f32 %v1006, %v1023
    %v1033 = vadd.f32 %v1007, %v1025
    %s1034 = sld [smem:[#allocation9 + $0x25]]
    %v1035 = vstv %s1034
    %v1036 = vmul.f32 %v1035, %v994
    %v1037 = vmul.f32 %v1035, %v995
    %v1038 = vmul.f32 %v1035, %v996
    %v1039 = vmul.f32 %v1035, %v997
    %1044 = vrot.lane.b32.xlu0 %v1036, 126
    %v1045 = vpop.permute.xlu0 %1044
    %1046 = vrot.lane.b32.xlu0 %v1037, 126
    %v1047 = vpop.permute.xlu0 %1046
    %1048 = vrot.lane.b32.xlu0 %v1038, 126
    %v1049 = vpop.permute.xlu0 %1048
    %1050 = vrot.lane.b32.xlu0 %v1039, 126
    %v1051 = vpop.permute.xlu0 %1050
    %v1056 = vadd.f32 %v1030, %v1045
    %v1057 = vadd.f32 %v1031, %v1047
    %v1058 = vadd.f32 %v1032, %v1049
    %v1059 = vadd.f32 %v1033, %v1051
    %s1060 = sld [smem:[#allocation9 + $0x26]]
    %v1061 = vstv %s1060
    %v1062 = vmul.f32 %v1061, %v994
    %v1063 = vmul.f32 %v1061, %v995
    %v1064 = vmul.f32 %v1061, %v996
    %v1065 = vmul.f32 %v1061, %v997
    %1070 = vrot.lane.b32.xlu0 %v1062, 125
    %v1071 = vpop.permute.xlu0 %1070
    %1072 = vrot.lane.b32.xlu0 %v1063, 125
    %v1073 = vpop.permute.xlu0 %1072
    %1074 = vrot.lane.b32.xlu0 %v1064, 125
    %v1075 = vpop.permute.xlu0 %1074
    %1076 = vrot.lane.b32.xlu0 %v1065, 125
    %v1077 = vpop.permute.xlu0 %1076
    %v1082 = vadd.f32 %v1056, %v1071
    %v1083 = vadd.f32 %v1057, %v1073
    %v1084 = vadd.f32 %v1058, %v1075
    %v1085 = vadd.f32 %v1059, %v1077
    %s1086 = sld [smem:[#allocation9 + $0x27]]
    %v1087 = vstv %s1086
    %v1088 = vmul.f32 %v1087, %v994
    %v1089 = vmul.f32 %v1087, %v995
    %v1090 = vmul.f32 %v1087, %v996
    %v1091 = vmul.f32 %v1087, %v997
    %1096 = vrot.lane.b32.xlu0 %v1088, 124
    %v1097 = vpop.permute.xlu0 %1096
    %1098 = vrot.lane.b32.xlu0 %v1089, 124
    %v1099 = vpop.permute.xlu0 %1098
    %1100 = vrot.lane.b32.xlu0 %v1090, 124
    %v1101 = vpop.permute.xlu0 %1100
    %1102 = vrot.lane.b32.xlu0 %v1091, 124
    %v1103 = vpop.permute.xlu0 %1102
    %v1108 = vadd.f32 %v1082, %v1097
    %v1109 = vadd.f32 %v1083, %v1099
    %v1110 = vadd.f32 %v1084, %v1101
    %v1111 = vadd.f32 %v1085, %v1103
    %s1112 = sld [smem:[#allocation9 + $0x28]]
    %v1113 = vstv %s1112
    %v1114 = vmul.f32 %v1113, %v994
    %v1115 = vmul.f32 %v1113, %v995
    %v1116 = vmul.f32 %v1113, %v996
    %v1117 = vmul.f32 %v1113, %v997
    %1122 = vrot.lane.b32.xlu0 %v1114, 123
    %v1123 = vpop.permute.xlu0 %1122
    %1124 = vrot.lane.b32.xlu0 %v1115, 123
    %v1125 = vpop.permute.xlu0 %1124
    %1126 = vrot.lane.b32.xlu0 %v1116, 123
    %v1127 = vpop.permute.xlu0 %1126
    %1128 = vrot.lane.b32.xlu0 %v1117, 123
    %v1129 = vpop.permute.xlu0 %1128
    %v1134 = vadd.f32 %v1108, %v1123
    %v1135 = vadd.f32 %v1109, %v1125
    %v1136 = vadd.f32 %v1110, %v1127
    %v1137 = vadd.f32 %v1111, %v1129
    %s1138 = sld [smem:[#allocation9 + $0x29]]
    %v1139 = vstv %s1138
    %v1140 = vmul.f32 %v1139, %v994
    %v1141 = vmul.f32 %v1139, %v995
    %v1142 = vmul.f32 %v1139, %v996
    %v1143 = vmul.f32 %v1139, %v997
    %1148 = vrot.lane.b32.xlu0 %v1140, 122
    %v1149 = vpop.permute.xlu0 %1148
    %1150 = vrot.lane.b32.xlu0 %v1141, 122
    %v1151 = vpop.permute.xlu0 %1150
    %1152 = vrot.lane.b32.xlu0 %v1142, 122
    %v1153 = vpop.permute.xlu0 %1152
    %1154 = vrot.lane.b32.xlu0 %v1143, 122
    %v1155 = vpop.permute.xlu0 %1154
    %v1160 = vadd.f32 %v1134, %v1149
    %v1161 = vadd.f32 %v1135, %v1151
    %v1162 = vadd.f32 %v1136, %v1153
    %v1163 = vadd.f32 %v1137, %v1155
    %v1164 = vld [vmem:[#allocation2 + $0x6] sm:$0xff]
    %v1165 = vld [vmem:[#allocation2 + $0xe] sm:$0xff]
    %v1166 = vld [vmem:[#allocation2 + $0x1e] sm:$0xff]
    %v1167 = vld [vmem:[#allocation2 + $0x26] sm:$0xff]
    %s1168 = sld [smem:[#allocation9 + $0x2a]]
    %v1169 = vstv %s1168
    %v1170 = vmul.f32 %v1169, %v1164
    %v1171 = vmul.f32 %v1169, %v1165
    %v1172 = vmul.f32 %v1169, %v1166
    %v1173 = vmul.f32 %v1169, %v1167
    %v1174 = vadd.f32 %v1160, %v1170
    %v1175 = vadd.f32 %v1161, %v1171
    %v1176 = vadd.f32 %v1162, %v1172
    %v1177 = vadd.f32 %v1163, %v1173
    %s1178 = sld [smem:[#allocation9 + $0x2b]]
    %v1179 = vstv %s1178
    %v1180 = vmul.f32 %v1179, %v1164
    %v1181 = vmul.f32 %v1179, %v1165
    %v1182 = vmul.f32 %v1179, %v1166
    %v1183 = vmul.f32 %v1179, %v1167
    %1188 = vrot.lane.b32.xlu0 %v1180, 127
    %v1189 = vpop.permute.xlu0 %1188
    %1190 = vrot.lane.b32.xlu0 %v1181, 127
    %v1191 = vpop.permute.xlu0 %1190
    %1192 = vrot.lane.b32.xlu0 %v1182, 127
    %v1193 = vpop.permute.xlu0 %1192
    %1194 = vrot.lane.b32.xlu0 %v1183, 127
    %v1195 = vpop.permute.xlu0 %1194
    %v1200 = vadd.f32 %v1174, %v1189
    %v1201 = vadd.f32 %v1175, %v1191
    %v1202 = vadd.f32 %v1176, %v1193
    %v1203 = vadd.f32 %v1177, %v1195
    %s1204 = sld [smem:[#allocation9 + $0x2c]]
    %v1205 = vstv %s1204
    %v1206 = vmul.f32 %v1205, %v1164
    %v1207 = vmul.f32 %v1205, %v1165
    %v1208 = vmul.f32 %v1205, %v1166
    %v1209 = vmul.f32 %v1205, %v1167
    %1214 = vrot.lane.b32.xlu0 %v1206, 126
    %v1215 = vpop.permute.xlu0 %1214
    %1216 = vrot.lane.b32.xlu0 %v1207, 126
    %v1217 = vpop.permute.xlu0 %1216
    %1218 = vrot.lane.b32.xlu0 %v1208, 126
    %v1219 = vpop.permute.xlu0 %1218
    %1220 = vrot.lane.b32.xlu0 %v1209, 126
    %v1221 = vpop.permute.xlu0 %1220
    %v1226 = vadd.f32 %v1200, %v1215
    %v1227 = vadd.f32 %v1201, %v1217
    %v1228 = vadd.f32 %v1202, %v1219
    %v1229 = vadd.f32 %v1203, %v1221
    %s1230 = sld [smem:[#allocation9 + $0x2d]]
    %v1231 = vstv %s1230
    %v1232 = vmul.f32 %v1231, %v1164
    %v1233 = vmul.f32 %v1231, %v1165
    %v1234 = vmul.f32 %v1231, %v1166
    %v1235 = vmul.f32 %v1231, %v1167
    %1240 = vrot.lane.b32.xlu0 %v1232, 125
    %v1241 = vpop.permute.xlu0 %1240
    %1242 = vrot.lane.b32.xlu0 %v1233, 125
    %v1243 = vpop.permute.xlu0 %1242
    %1244 = vrot.lane.b32.xlu0 %v1234, 125
    %v1245 = vpop.permute.xlu0 %1244
    %1246 = vrot.lane.b32.xlu0 %v1235, 125
    %v1247 = vpop.permute.xlu0 %1246
    %v1252 = vadd.f32 %v1226, %v1241
    %v1253 = vadd.f32 %v1227, %v1243
    %v1254 = vadd.f32 %v1228, %v1245
    %v1255 = vadd.f32 %v1229, %v1247
    %s1256 = sld [smem:[#allocation9 + $0x2e]]
    %v1257 = vstv %s1256
    %v1258 = vmul.f32 %v1257, %v1164
    %v1259 = vmul.f32 %v1257, %v1165
    %v1260 = vmul.f32 %v1257, %v1166
    %v1261 = vmul.f32 %v1257, %v1167
    %1266 = vrot.lane.b32.xlu0 %v1258, 124
    %v1267 = vpop.permute.xlu0 %1266
    %1268 = vrot.lane.b32.xlu0 %v1259, 124
    %v1269 = vpop.permute.xlu0 %1268
    %1270 = vrot.lane.b32.xlu0 %v1260, 124
    %v1271 = vpop.permute.xlu0 %1270
    %1272 = vrot.lane.b32.xlu0 %v1261, 124
    %v1273 = vpop.permute.xlu0 %1272
    %v1278 = vadd.f32 %v1252, %v1267
    %v1279 = vadd.f32 %v1253, %v1269
    %v1280 = vadd.f32 %v1254, %v1271
    %v1281 = vadd.f32 %v1255, %v1273
    %s1282 = sld [smem:[#allocation9 + $0x2f]]
    %v1283 = vstv %s1282
    %v1284 = vmul.f32 %v1283, %v1164
    %v1285 = vmul.f32 %v1283, %v1165
    %v1286 = vmul.f32 %v1283, %v1166
    %v1287 = vmul.f32 %v1283, %v1167
    %1292 = vrot.lane.b32.xlu0 %v1284, 123
    %v1293 = vpop.permute.xlu0 %1292
    %1294 = vrot.lane.b32.xlu0 %v1285, 123
    %v1295 = vpop.permute.xlu0 %1294
    %1296 = vrot.lane.b32.xlu0 %v1286, 123
    %v1297 = vpop.permute.xlu0 %1296
    %1298 = vrot.lane.b32.xlu0 %v1287, 123
    %v1299 = vpop.permute.xlu0 %1298
    %v1304 = vadd.f32 %v1278, %v1293
    %v1305 = vadd.f32 %v1279, %v1295
    %v1306 = vadd.f32 %v1280, %v1297
    %v1307 = vadd.f32 %v1281, %v1299
    %s1308 = sld [smem:[#allocation9 + $0x30]]
    %v1309 = vstv %s1308
    %v1310 = vmul.f32 %v1309, %v1164
    %v1311 = vmul.f32 %v1309, %v1165
    %v1312 = vmul.f32 %v1309, %v1166
    %v1313 = vmul.f32 %v1309, %v1167
    %1318 = vrot.lane.b32.xlu0 %v1310, 122
    %v1319 = vpop.permute.xlu0 %1318
    %1320 = vrot.lane.b32.xlu0 %v1311, 122
    %v1321 = vpop.permute.xlu0 %1320
    %1322 = vrot.lane.b32.xlu0 %v1312, 122
    %v1323 = vpop.permute.xlu0 %1322
    %1324 = vrot.lane.b32.xlu0 %v1313, 122
    %v1325 = vpop.permute.xlu0 %1324
    %v1330 = vadd.f32 %v1304, %v1319
    %v1331 = vadd.f32 %v1305, %v1321
    %v1332 = vadd.f32 %v1306, %v1323
    %v1333 = vadd.f32 %v1307, %v1325
    %v1334 = vld [vmem:[#allocation3] sm:$0xff]
    %v1335 = vld [vmem:[#allocation3 + $0x8] sm:$0xff]
    %v1336 = vld [vmem:[#allocation3 + $0x18] sm:$0xff]
    %v1337 = vld [vmem:[#allocation3 + $0x20] sm:$0xff]
    %s1338 = sld [smem:[#allocation9 + $0x31]]
    %v1339 = vstv %s1338
    %v1340 = vmul.f32 %v1339, %v1334
    %v1341 = vmul.f32 %v1339, %v1335
    %v1342 = vmul.f32 %v1339, %v1336
    %v1343 = vmul.f32 %v1339, %v1337
    %v1344 = vadd.f32 %v1330, %v1340
    %v1345 = vadd.f32 %v1331, %v1341
    %v1346 = vadd.f32 %v1332, %v1342
    %v1347 = vadd.f32 %v1333, %v1343
    %s1348 = sld [smem:[#allocation9 + $0x32]]
    %v1349 = vstv %s1348
    %v1350 = vmul.f32 %v1349, %v1334
    %v1351 = vmul.f32 %v1349, %v1335
    %v1352 = vmul.f32 %v1349, %v1336
    %v1353 = vmul.f32 %v1349, %v1337
    %1358 = vrot.lane.b32.xlu0 %v1350, 127
    %v1359 = vpop.permute.xlu0 %1358
    %1360 = vrot.lane.b32.xlu0 %v1351, 127
    %v1361 = vpop.permute.xlu0 %1360
    %1362 = vrot.lane.b32.xlu0 %v1352, 127
    %v1363 = vpop.permute.xlu0 %1362
    %1364 = vrot.lane.b32.xlu0 %v1353, 127
    %v1365 = vpop.permute.xlu0 %1364
    %v1370 = vadd.f32 %v1344, %v1359
    %v1371 = vadd.f32 %v1345, %v1361
    %v1372 = vadd.f32 %v1346, %v1363
    %v1373 = vadd.f32 %v1347, %v1365
    %s1374 = sld [smem:[#allocation9 + $0x33]]
    %v1375 = vstv %s1374
    %v1376 = vmul.f32 %v1375, %v1334
    %v1377 = vmul.f32 %v1375, %v1335
    %v1378 = vmul.f32 %v1375, %v1336
    %v1379 = vmul.f32 %v1375, %v1337
    %1384 = vrot.lane.b32.xlu0 %v1376, 126
    %v1385 = vpop.permute.xlu0 %1384
    %1386 = vrot.lane.b32.xlu0 %v1377, 126
    %v1387 = vpop.permute.xlu0 %1386
    %1388 = vrot.lane.b32.xlu0 %v1378, 126
    %v1389 = vpop.permute.xlu0 %1388
    %1390 = vrot.lane.b32.xlu0 %v1379, 126
    %v1391 = vpop.permute.xlu0 %1390
    %v1396 = vadd.f32 %v1370, %v1385
    %v1397 = vadd.f32 %v1371, %v1387
    %v1398 = vadd.f32 %v1372, %v1389
    %v1399 = vadd.f32 %v1373, %v1391
    %s1400 = sld [smem:[#allocation9 + $0x34]]
    %v1401 = vstv %s1400
    %v1402 = vmul.f32 %v1401, %v1334
    %v1403 = vmul.f32 %v1401, %v1335
    %v1404 = vmul.f32 %v1401, %v1336
    %v1405 = vmul.f32 %v1401, %v1337
    %1410 = vrot.lane.b32.xlu0 %v1402, 125
    %v1411 = vpop.permute.xlu0 %1410
    %1412 = vrot.lane.b32.xlu0 %v1403, 125
    %v1413 = vpop.permute.xlu0 %1412
    %1414 = vrot.lane.b32.xlu0 %v1404, 125
    %v1415 = vpop.permute.xlu0 %1414
    %1416 = vrot.lane.b32.xlu0 %v1405, 125
    %v1417 = vpop.permute.xlu0 %1416
    %v1422 = vadd.f32 %v1396, %v1411
    %v1423 = vadd.f32 %v1397, %v1413
    %v1424 = vadd.f32 %v1398, %v1415
    %v1425 = vadd.f32 %v1399, %v1417
    %s1426 = sld [smem:[#allocation9 + $0x35]]
    %v1427 = vstv %s1426
    %v1428 = vmul.f32 %v1427, %v1334
    %v1429 = vmul.f32 %v1427, %v1335
    %v1430 = vmul.f32 %v1427, %v1336
    %v1431 = vmul.f32 %v1427, %v1337
    %1436 = vrot.lane.b32.xlu0 %v1428, 124
    %v1437 = vpop.permute.xlu0 %1436
    %1438 = vrot.lane.b32.xlu0 %v1429, 124
    %v1439 = vpop.permute.xlu0 %1438
    %1440 = vrot.lane.b32.xlu0 %v1430, 124
    %v1441 = vpop.permute.xlu0 %1440
    %1442 = vrot.lane.b32.xlu0 %v1431, 124
    %v1443 = vpop.permute.xlu0 %1442
    %v1448 = vadd.f32 %v1422, %v1437
    %v1449 = vadd.f32 %v1423, %v1439
    %v1450 = vadd.f32 %v1424, %v1441
    %v1451 = vadd.f32 %v1425, %v1443
    %s1452 = sld [smem:[#allocation9 + $0x36]]
    %v1453 = vstv %s1452
    %v1454 = vmul.f32 %v1453, %v1334
    %v1455 = vmul.f32 %v1453, %v1335
    %v1456 = vmul.f32 %v1453, %v1336
    %v1457 = vmul.f32 %v1453, %v1337
    %1462 = vrot.lane.b32.xlu0 %v1454, 123
    %v1463 = vpop.permute.xlu0 %1462
    %1464 = vrot.lane.b32.xlu0 %v1455, 123
    %v1465 = vpop.permute.xlu0 %1464
    %1466 = vrot.lane.b32.xlu0 %v1456, 123
    %v1467 = vpop.permute.xlu0 %1466
    %1468 = vrot.lane.b32.xlu0 %v1457, 123
    %v1469 = vpop.permute.xlu0 %1468
    %v1474 = vadd.f32 %v1448, %v1463
    %v1475 = vadd.f32 %v1449, %v1465
    %v1476 = vadd.f32 %v1450, %v1467
    %v1477 = vadd.f32 %v1451, %v1469
    %s1478 = sld [smem:[#allocation9 + $0x37]]
    %v1479 = vstv %s1478
    %v1480 = vmul.f32 %v1479, %v1334
    %v1481 = vmul.f32 %v1479, %v1335
    %v1482 = vmul.f32 %v1479, %v1336
    %v1483 = vmul.f32 %v1479, %v1337
    %1488 = vrot.lane.b32.xlu0 %v1480, 122
    %v1489 = vpop.permute.xlu0 %1488
    %1490 = vrot.lane.b32.xlu0 %v1481, 122
    %v1491 = vpop.permute.xlu0 %1490
    %1492 = vrot.lane.b32.xlu0 %v1482, 122
    %v1493 = vpop.permute.xlu0 %1492
    %1494 = vrot.lane.b32.xlu0 %v1483, 122
    %v1495 = vpop.permute.xlu0 %1494
    %v1500 = vadd.f32 %v1474, %v1489
    %v1501 = vadd.f32 %v1475, %v1491
    %v1502 = vadd.f32 %v1476, %v1493
    %v1503 = vadd.f32 %v1477, %v1495
    %v1504 = vld [vmem:[#allocation3 + $0x1] sm:$0xff]
    %v1505 = vld [vmem:[#allocation3 + $0x9] sm:$0xff]
    %v1506 = vld [vmem:[#allocation3 + $0x19] sm:$0xff]
    %v1507 = vld [vmem:[#allocation3 + $0x21] sm:$0xff]
    %s1508 = sld [smem:[#allocation9 + $0x38]]
    %v1509 = vstv %s1508
    %v1510 = vmul.f32 %v1509, %v1504
    %v1511 = vmul.f32 %v1509, %v1505
    %v1512 = vmul.f32 %v1509, %v1506
    %v1513 = vmul.f32 %v1509, %v1507
    %v1514 = vadd.f32 %v1500, %v1510
    %v1515 = vadd.f32 %v1501, %v1511
    %v1516 = vadd.f32 %v1502, %v1512
    %v1517 = vadd.f32 %v1503, %v1513
    %s1518 = sld [smem:[#allocation9 + $0x39]]
    %v1519 = vstv %s1518
    %v1520 = vmul.f32 %v1519, %v1504
    %v1521 = vmul.f32 %v1519, %v1505
    %v1522 = vmul.f32 %v1519, %v1506
    %v1523 = vmul.f32 %v1519, %v1507
    %1528 = vrot.lane.b32.xlu0 %v1520, 127
    %v1529 = vpop.permute.xlu0 %1528
    %1530 = vrot.lane.b32.xlu0 %v1521, 127
    %v1531 = vpop.permute.xlu0 %1530
    %1532 = vrot.lane.b32.xlu0 %v1522, 127
    %v1533 = vpop.permute.xlu0 %1532
    %1534 = vrot.lane.b32.xlu0 %v1523, 127
    %v1535 = vpop.permute.xlu0 %1534
    %v1540 = vadd.f32 %v1514, %v1529
    %v1541 = vadd.f32 %v1515, %v1531
    %v1542 = vadd.f32 %v1516, %v1533
    %v1543 = vadd.f32 %v1517, %v1535
    %s1544 = sld [smem:[#allocation9 + $0x3a]]
    %v1545 = vstv %s1544
    %v1546 = vmul.f32 %v1545, %v1504
    %v1547 = vmul.f32 %v1545, %v1505
    %v1548 = vmul.f32 %v1545, %v1506
    %v1549 = vmul.f32 %v1545, %v1507
    %1554 = vrot.lane.b32.xlu0 %v1546, 126
    %v1555 = vpop.permute.xlu0 %1554
    %1556 = vrot.lane.b32.xlu0 %v1547, 126
    %v1557 = vpop.permute.xlu0 %1556
    %1558 = vrot.lane.b32.xlu0 %v1548, 126
    %v1559 = vpop.permute.xlu0 %1558
    %1560 = vrot.lane.b32.xlu0 %v1549, 126
    %v1561 = vpop.permute.xlu0 %1560
    %v1566 = vadd.f32 %v1540, %v1555
    %v1567 = vadd.f32 %v1541, %v1557
    %v1568 = vadd.f32 %v1542, %v1559
    %v1569 = vadd.f32 %v1543, %v1561
    %s1570 = sld [smem:[#allocation9 + $0x3b]]
    %v1571 = vstv %s1570
    %v1572 = vmul.f32 %v1571, %v1504
    %v1573 = vmul.f32 %v1571, %v1505
    %v1574 = vmul.f32 %v1571, %v1506
    %v1575 = vmul.f32 %v1571, %v1507
    %1580 = vrot.lane.b32.xlu0 %v1572, 125
    %v1581 = vpop.permute.xlu0 %1580
    %1582 = vrot.lane.b32.xlu0 %v1573, 125
    %v1583 = vpop.permute.xlu0 %1582
    %1584 = vrot.lane.b32.xlu0 %v1574, 125
    %v1585 = vpop.permute.xlu0 %1584
    %1586 = vrot.lane.b32.xlu0 %v1575, 125
    %v1587 = vpop.permute.xlu0 %1586
    %v1592 = vadd.f32 %v1566, %v1581
    %v1593 = vadd.f32 %v1567, %v1583
    %v1594 = vadd.f32 %v1568, %v1585
    %v1595 = vadd.f32 %v1569, %v1587
    %s1596 = sld [smem:[#allocation9 + $0x3c]]
    %v1597 = vstv %s1596
    %v1598 = vmul.f32 %v1597, %v1504
    %v1599 = vmul.f32 %v1597, %v1505
    %v1600 = vmul.f32 %v1597, %v1506
    %v1601 = vmul.f32 %v1597, %v1507
    %1606 = vrot.lane.b32.xlu0 %v1598, 124
    %v1607 = vpop.permute.xlu0 %1606
    %1608 = vrot.lane.b32.xlu0 %v1599, 124
    %v1609 = vpop.permute.xlu0 %1608
    %1610 = vrot.lane.b32.xlu0 %v1600, 124
    %v1611 = vpop.permute.xlu0 %1610
    %1612 = vrot.lane.b32.xlu0 %v1601, 124
    %v1613 = vpop.permute.xlu0 %1612
    %v1618 = vadd.f32 %v1592, %v1607
    %v1619 = vadd.f32 %v1593, %v1609
    %v1620 = vadd.f32 %v1594, %v1611
    %v1621 = vadd.f32 %v1595, %v1613
    %s1622 = sld [smem:[#allocation9 + $0x3d]]
    %v1623 = vstv %s1622
    %v1624 = vmul.f32 %v1623, %v1504
    %v1625 = vmul.f32 %v1623, %v1505
    %v1626 = vmul.f32 %v1623, %v1506
    %v1627 = vmul.f32 %v1623, %v1507
    %1632 = vrot.lane.b32.xlu0 %v1624, 123
    %v1633 = vpop.permute.xlu0 %1632
    %1634 = vrot.lane.b32.xlu0 %v1625, 123
    %v1635 = vpop.permute.xlu0 %1634
    %1636 = vrot.lane.b32.xlu0 %v1626, 123
    %v1637 = vpop.permute.xlu0 %1636
    %1638 = vrot.lane.b32.xlu0 %v1627, 123
    %v1639 = vpop.permute.xlu0 %1638
    %v1644 = vadd.f32 %v1618, %v1633
    %v1645 = vadd.f32 %v1619, %v1635
    %v1646 = vadd.f32 %v1620, %v1637
    %v1647 = vadd.f32 %v1621, %v1639
    %s1648 = sld [smem:[#allocation9 + $0x3e]]
    %v1649 = vstv %s1648
    %v1650 = vmul.f32 %v1649, %v1504
    %v1651 = vmul.f32 %v1649, %v1505
    %v1652 = vmul.f32 %v1649, %v1506
    %v1653 = vmul.f32 %v1649, %v1507
    %1658 = vrot.lane.b32.xlu0 %v1650, 122
    %v1659 = vpop.permute.xlu0 %1658
    %1660 = vrot.lane.b32.xlu0 %v1651, 122
    %v1661 = vpop.permute.xlu0 %1660
    %1662 = vrot.lane.b32.xlu0 %v1652, 122
    %v1663 = vpop.permute.xlu0 %1662
    %1664 = vrot.lane.b32.xlu0 %v1653, 122
    %v1665 = vpop.permute.xlu0 %1664
    %v1670 = vadd.f32 %v1644, %v1659
    %v1671 = vadd.f32 %v1645, %v1661
    %v1672 = vadd.f32 %v1646, %v1663
    %v1673 = vadd.f32 %v1647, %v1665
    %v1674 = vld [vmem:[#allocation3 + $0x2] sm:$0xff]
    %v1675 = vld [vmem:[#allocation3 + $0xa] sm:$0xff]
    %v1676 = vld [vmem:[#allocation3 + $0x1a] sm:$0xff]
    %v1677 = vld [vmem:[#allocation3 + $0x22] sm:$0xff]
    %s1678 = sld [smem:[#allocation9 + $0x3f]]
    %v1679 = vstv %s1678
    %v1680 = vmul.f32 %v1679, %v1674
    %v1681 = vmul.f32 %v1679, %v1675
    %v1682 = vmul.f32 %v1679, %v1676
    %v1683 = vmul.f32 %v1679, %v1677
    %v1684 = vadd.f32 %v1670, %v1680
    %v1685 = vadd.f32 %v1671, %v1681
    %v1686 = vadd.f32 %v1672, %v1682
    %v1687 = vadd.f32 %v1673, %v1683
    %s1688 = sld [smem:[#allocation9 + $0x40]]
    %v1689 = vstv %s1688
    %v1690 = vmul.f32 %v1689, %v1674
    %v1691 = vmul.f32 %v1689, %v1675
    %v1692 = vmul.f32 %v1689, %v1676
    %v1693 = vmul.f32 %v1689, %v1677
    %1698 = vrot.lane.b32.xlu0 %v1690, 127
    %v1699 = vpop.permute.xlu0 %1698
    %1700 = vrot.lane.b32.xlu0 %v1691, 127
    %v1701 = vpop.permute.xlu0 %1700
    %1702 = vrot.lane.b32.xlu0 %v1692, 127
    %v1703 = vpop.permute.xlu0 %1702
    %1704 = vrot.lane.b32.xlu0 %v1693, 127
    %v1705 = vpop.permute.xlu0 %1704
    %v1710 = vadd.f32 %v1684, %v1699
    %v1711 = vadd.f32 %v1685, %v1701
    %v1712 = vadd.f32 %v1686, %v1703
    %v1713 = vadd.f32 %v1687, %v1705
    %s1714 = sld [smem:[#allocation9 + $0x41]]
    %v1715 = vstv %s1714
    %v1716 = vmul.f32 %v1715, %v1674
    %v1717 = vmul.f32 %v1715, %v1675
    %v1718 = vmul.f32 %v1715, %v1676
    %v1719 = vmul.f32 %v1715, %v1677
    %1724 = vrot.lane.b32.xlu0 %v1716, 126
    %v1725 = vpop.permute.xlu0 %1724
    %1726 = vrot.lane.b32.xlu0 %v1717, 126
    %v1727 = vpop.permute.xlu0 %1726
    %1728 = vrot.lane.b32.xlu0 %v1718, 126
    %v1729 = vpop.permute.xlu0 %1728
    %1730 = vrot.lane.b32.xlu0 %v1719, 126
    %v1731 = vpop.permute.xlu0 %1730
    %v1736 = vadd.f32 %v1710, %v1725
    %v1737 = vadd.f32 %v1711, %v1727
    %v1738 = vadd.f32 %v1712, %v1729
    %v1739 = vadd.f32 %v1713, %v1731
    %s1740 = sld [smem:[#allocation9 + $0x42]]
    %v1741 = vstv %s1740
    %v1742 = vmul.f32 %v1741, %v1674
    %v1743 = vmul.f32 %v1741, %v1675
    %v1744 = vmul.f32 %v1741, %v1676
    %v1745 = vmul.f32 %v1741, %v1677
    %1750 = vrot.lane.b32.xlu0 %v1742, 125
    %v1751 = vpop.permute.xlu0 %1750
    %1752 = vrot.lane.b32.xlu0 %v1743, 125
    %v1753 = vpop.permute.xlu0 %1752
    %1754 = vrot.lane.b32.xlu0 %v1744, 125
    %v1755 = vpop.permute.xlu0 %1754
    %1756 = vrot.lane.b32.xlu0 %v1745, 125
    %v1757 = vpop.permute.xlu0 %1756
    %v1762 = vadd.f32 %v1736, %v1751
    %v1763 = vadd.f32 %v1737, %v1753
    %v1764 = vadd.f32 %v1738, %v1755
    %v1765 = vadd.f32 %v1739, %v1757
    %s1766 = sld [smem:[#allocation9 + $0x43]]
    %v1767 = vstv %s1766
    %v1768 = vmul.f32 %v1767, %v1674
    %v1769 = vmul.f32 %v1767, %v1675
    %v1770 = vmul.f32 %v1767, %v1676
    %v1771 = vmul.f32 %v1767, %v1677
    %1776 = vrot.lane.b32.xlu0 %v1768, 124
    %v1777 = vpop.permute.xlu0 %1776
    %1778 = vrot.lane.b32.xlu0 %v1769, 124
    %v1779 = vpop.permute.xlu0 %1778
    %1780 = vrot.lane.b32.xlu0 %v1770, 124
    %v1781 = vpop.permute.xlu0 %1780
    %1782 = vrot.lane.b32.xlu0 %v1771, 124
    %v1783 = vpop.permute.xlu0 %1782
    %v1788 = vadd.f32 %v1762, %v1777
    %v1789 = vadd.f32 %v1763, %v1779
    %v1790 = vadd.f32 %v1764, %v1781
    %v1791 = vadd.f32 %v1765, %v1783
    %s1792 = sld [smem:[#allocation9 + $0x44]]
    %v1793 = vstv %s1792
    %v1794 = vmul.f32 %v1793, %v1674
    %v1795 = vmul.f32 %v1793, %v1675
    %v1796 = vmul.f32 %v1793, %v1676
    %v1797 = vmul.f32 %v1793, %v1677
    %1802 = vrot.lane.b32.xlu0 %v1794, 123
    %v1803 = vpop.permute.xlu0 %1802
    %1804 = vrot.lane.b32.xlu0 %v1795, 123
    %v1805 = vpop.permute.xlu0 %1804
    %1806 = vrot.lane.b32.xlu0 %v1796, 123
    %v1807 = vpop.permute.xlu0 %1806
    %1808 = vrot.lane.b32.xlu0 %v1797, 123
    %v1809 = vpop.permute.xlu0 %1808
    %v1814 = vadd.f32 %v1788, %v1803
    %v1815 = vadd.f32 %v1789, %v1805
    %v1816 = vadd.f32 %v1790, %v1807
    %v1817 = vadd.f32 %v1791, %v1809
    %s1818 = sld [smem:[#allocation9 + $0x45]]
    %v1819 = vstv %s1818
    %v1820 = vmul.f32 %v1819, %v1674
    %v1821 = vmul.f32 %v1819, %v1675
    %v1822 = vmul.f32 %v1819, %v1676
    %v1823 = vmul.f32 %v1819, %v1677
    %1828 = vrot.lane.b32.xlu0 %v1820, 122
    %v1829 = vpop.permute.xlu0 %1828
    %1830 = vrot.lane.b32.xlu0 %v1821, 122
    %v1831 = vpop.permute.xlu0 %1830
    %1832 = vrot.lane.b32.xlu0 %v1822, 122
    %v1833 = vpop.permute.xlu0 %1832
    %1834 = vrot.lane.b32.xlu0 %v1823, 122
    %v1835 = vpop.permute.xlu0 %1834
    %v1840 = vadd.f32 %v1814, %v1829
    %v1841 = vadd.f32 %v1815, %v1831
    %v1842 = vadd.f32 %v1816, %v1833
    %v1843 = vadd.f32 %v1817, %v1835
    %v1844 = vld [vmem:[#allocation3 + $0x3] sm:$0xff]
    %v1845 = vld [vmem:[#allocation3 + $0xb] sm:$0xff]
    %v1846 = vld [vmem:[#allocation3 + $0x1b] sm:$0xff]
    %v1847 = vld [vmem:[#allocation3 + $0x23] sm:$0xff]
    %s1848 = sld [smem:[#allocation9 + $0x46]]
    %v1849 = vstv %s1848
    %v1850 = vmul.f32 %v1849, %v1844
    %v1851 = vmul.f32 %v1849, %v1845
    %v1852 = vmul.f32 %v1849, %v1846
    %v1853 = vmul.f32 %v1849, %v1847
    %v1854 = vadd.f32 %v1840, %v1850
    %v1855 = vadd.f32 %v1841, %v1851
    %v1856 = vadd.f32 %v1842, %v1852
    %v1857 = vadd.f32 %v1843, %v1853
    %s1858 = sld [smem:[#allocation9 + $0x47]]
    %v1859 = vstv %s1858
    %v1860 = vmul.f32 %v1859, %v1844
    %v1861 = vmul.f32 %v1859, %v1845
    %v1862 = vmul.f32 %v1859, %v1846
    %v1863 = vmul.f32 %v1859, %v1847
    %1868 = vrot.lane.b32.xlu0 %v1860, 127
    %v1869 = vpop.permute.xlu0 %1868
    %1870 = vrot.lane.b32.xlu0 %v1861, 127
    %v1871 = vpop.permute.xlu0 %1870
    %1872 = vrot.lane.b32.xlu0 %v1862, 127
    %v1873 = vpop.permute.xlu0 %1872
    %1874 = vrot.lane.b32.xlu0 %v1863, 127
    %v1875 = vpop.permute.xlu0 %1874
    %v1880 = vadd.f32 %v1854, %v1869
    %v1881 = vadd.f32 %v1855, %v1871
    %v1882 = vadd.f32 %v1856, %v1873
    %v1883 = vadd.f32 %v1857, %v1875
    %s1884 = sld [smem:[#allocation9 + $0x48]]
    %v1885 = vstv %s1884
    %v1886 = vmul.f32 %v1885, %v1844
    %v1887 = vmul.f32 %v1885, %v1845
    %v1888 = vmul.f32 %v1885, %v1846
    %v1889 = vmul.f32 %v1885, %v1847
    %1894 = vrot.lane.b32.xlu0 %v1886, 126
    %v1895 = vpop.permute.xlu0 %1894
    %1896 = vrot.lane.b32.xlu0 %v1887, 126
    %v1897 = vpop.permute.xlu0 %1896
    %1898 = vrot.lane.b32.xlu0 %v1888, 126
    %v1899 = vpop.permute.xlu0 %1898
    %1900 = vrot.lane.b32.xlu0 %v1889, 126
    %v1901 = vpop.permute.xlu0 %1900
    %v1906 = vadd.f32 %v1880, %v1895
    %v1907 = vadd.f32 %v1881, %v1897
    %v1908 = vadd.f32 %v1882, %v1899
    %v1909 = vadd.f32 %v1883, %v1901
    %s1910 = sld [smem:[#allocation9 + $0x49]]
    %v1911 = vstv %s1910
    %v1912 = vmul.f32 %v1911, %v1844
    %v1913 = vmul.f32 %v1911, %v1845
    %v1914 = vmul.f32 %v1911, %v1846
    %v1915 = vmul.f32 %v1911, %v1847
    %1920 = vrot.lane.b32.xlu0 %v1912, 125
    %v1921 = vpop.permute.xlu0 %1920
    %1922 = vrot.lane.b32.xlu0 %v1913, 125
    %v1923 = vpop.permute.xlu0 %1922
    %1924 = vrot.lane.b32.xlu0 %v1914, 125
    %v1925 = vpop.permute.xlu0 %1924
    %1926 = vrot.lane.b32.xlu0 %v1915, 125
    %v1927 = vpop.permute.xlu0 %1926
    %v1932 = vadd.f32 %v1906, %v1921
    %v1933 = vadd.f32 %v1907, %v1923
    %v1934 = vadd.f32 %v1908, %v1925
    %v1935 = vadd.f32 %v1909, %v1927
    %s1936 = sld [smem:[#allocation9 + $0x4a]]
    %v1937 = vstv %s1936
    %v1938 = vmul.f32 %v1937, %v1844
    %v1939 = vmul.f32 %v1937, %v1845
    %v1940 = vmul.f32 %v1937, %v1846
    %v1941 = vmul.f32 %v1937, %v1847
    %1946 = vrot.lane.b32.xlu0 %v1938, 124
    %v1947 = vpop.permute.xlu0 %1946
    %1948 = vrot.lane.b32.xlu0 %v1939, 124
    %v1949 = vpop.permute.xlu0 %1948
    %1950 = vrot.lane.b32.xlu0 %v1940, 124
    %v1951 = vpop.permute.xlu0 %1950
    %1952 = vrot.lane.b32.xlu0 %v1941, 124
    %v1953 = vpop.permute.xlu0 %1952
    %v1958 = vadd.f32 %v1932, %v1947
    %v1959 = vadd.f32 %v1933, %v1949
    %v1960 = vadd.f32 %v1934, %v1951
    %v1961 = vadd.f32 %v1935, %v1953
    %s1962 = sld [smem:[#allocation9 + $0x4b]]
    %v1963 = vstv %s1962
    %v1964 = vmul.f32 %v1963, %v1844
    %v1965 = vmul.f32 %v1963, %v1845
    %v1966 = vmul.f32 %v1963, %v1846
    %v1967 = vmul.f32 %v1963, %v1847
    %1972 = vrot.lane.b32.xlu0 %v1964, 123
    %v1973 = vpop.permute.xlu0 %1972
    %1974 = vrot.lane.b32.xlu0 %v1965, 123
    %v1975 = vpop.permute.xlu0 %1974
    %1976 = vrot.lane.b32.xlu0 %v1966, 123
    %v1977 = vpop.permute.xlu0 %1976
    %1978 = vrot.lane.b32.xlu0 %v1967, 123
    %v1979 = vpop.permute.xlu0 %1978
    %v1984 = vadd.f32 %v1958, %v1973
    %v1985 = vadd.f32 %v1959, %v1975
    %v1986 = vadd.f32 %v1960, %v1977
    %v1987 = vadd.f32 %v1961, %v1979
    %s1988 = sld [smem:[#allocation9 + $0x4c]]
    %v1989 = vstv %s1988
    %v1990 = vmul.f32 %v1989, %v1844
    %v1991 = vmul.f32 %v1989, %v1845
    %v1992 = vmul.f32 %v1989, %v1846
    %v1993 = vmul.f32 %v1989, %v1847
    %1998 = vrot.lane.b32.xlu0 %v1990, 122
    %v1999 = vpop.permute.xlu0 %1998
    %2000 = vrot.lane.b32.xlu0 %v1991, 122
    %v2001 = vpop.permute.xlu0 %2000
    %2002 = vrot.lane.b32.xlu0 %v1992, 122
    %v2003 = vpop.permute.xlu0 %2002
    %2004 = vrot.lane.b32.xlu0 %v1993, 122
    %v2005 = vpop.permute.xlu0 %2004
    %v2010 = vadd.f32 %v1984, %v1999
    %v2011 = vadd.f32 %v1985, %v2001
    %v2012 = vadd.f32 %v1986, %v2003
    %v2013 = vadd.f32 %v1987, %v2005
    %v2014 = vld [vmem:[#allocation3 + $0x4] sm:$0xff]
    %v2015 = vld [vmem:[#allocation3 + $0xc] sm:$0xff]
    %v2016 = vld [vmem:[#allocation3 + $0x1c] sm:$0xff]
    %v2017 = vld [vmem:[#allocation3 + $0x24] sm:$0xff]
    %s2018 = sld [smem:[#allocation9 + $0x4d]]
    %v2019 = vstv %s2018
    %v2020 = vmul.f32 %v2019, %v2014
    %v2021 = vmul.f32 %v2019, %v2015
    %v2022 = vmul.f32 %v2019, %v2016
    %v2023 = vmul.f32 %v2019, %v2017
    %v2024 = vadd.f32 %v2010, %v2020
    %v2025 = vadd.f32 %v2011, %v2021
    %v2026 = vadd.f32 %v2012, %v2022
    %v2027 = vadd.f32 %v2013, %v2023
    %s2028 = sld [smem:[#allocation9 + $0x4e]]
    %v2029 = vstv %s2028
    %v2030 = vmul.f32 %v2029, %v2014
    %v2031 = vmul.f32 %v2029, %v2015
    %v2032 = vmul.f32 %v2029, %v2016
    %v2033 = vmul.f32 %v2029, %v2017
    %2038 = vrot.lane.b32.xlu0 %v2030, 127
    %v2039 = vpop.permute.xlu0 %2038
    %2040 = vrot.lane.b32.xlu0 %v2031, 127
    %v2041 = vpop.permute.xlu0 %2040
    %2042 = vrot.lane.b32.xlu0 %v2032, 127
    %v2043 = vpop.permute.xlu0 %2042
    %2044 = vrot.lane.b32.xlu0 %v2033, 127
    %v2045 = vpop.permute.xlu0 %2044
    %v2050 = vadd.f32 %v2024, %v2039
    %v2051 = vadd.f32 %v2025, %v2041
    %v2052 = vadd.f32 %v2026, %v2043
    %v2053 = vadd.f32 %v2027, %v2045
    %s2054 = sld [smem:[#allocation9 + $0x4f]]
    %v2055 = vstv %s2054
    %v2056 = vmul.f32 %v2055, %v2014
    %v2057 = vmul.f32 %v2055, %v2015
    %v2058 = vmul.f32 %v2055, %v2016
    %v2059 = vmul.f32 %v2055, %v2017
    %2064 = vrot.lane.b32.xlu0 %v2056, 126
    %v2065 = vpop.permute.xlu0 %2064
    %2066 = vrot.lane.b32.xlu0 %v2057, 126
    %v2067 = vpop.permute.xlu0 %2066
    %2068 = vrot.lane.b32.xlu0 %v2058, 126
    %v2069 = vpop.permute.xlu0 %2068
    %2070 = vrot.lane.b32.xlu0 %v2059, 126
    %v2071 = vpop.permute.xlu0 %2070
    %v2076 = vadd.f32 %v2050, %v2065
    %v2077 = vadd.f32 %v2051, %v2067
    %v2078 = vadd.f32 %v2052, %v2069
    %v2079 = vadd.f32 %v2053, %v2071
    %s2080 = sld [smem:[#allocation9 + $0x50]]
    %v2081 = vstv %s2080
    %v2082 = vmul.f32 %v2081, %v2014
    %v2083 = vmul.f32 %v2081, %v2015
    %v2084 = vmul.f32 %v2081, %v2016
    %v2085 = vmul.f32 %v2081, %v2017
    %2090 = vrot.lane.b32.xlu0 %v2082, 125
    %v2091 = vpop.permute.xlu0 %2090
    %2092 = vrot.lane.b32.xlu0 %v2083, 125
    %v2093 = vpop.permute.xlu0 %2092
    %2094 = vrot.lane.b32.xlu0 %v2084, 125
    %v2095 = vpop.permute.xlu0 %2094
    %2096 = vrot.lane.b32.xlu0 %v2085, 125
    %v2097 = vpop.permute.xlu0 %2096
    %v2102 = vadd.f32 %v2076, %v2091
    %v2103 = vadd.f32 %v2077, %v2093
    %v2104 = vadd.f32 %v2078, %v2095
    %v2105 = vadd.f32 %v2079, %v2097
    %s2106 = sld [smem:[#allocation9 + $0x51]]
    %v2107 = vstv %s2106
    %v2108 = vmul.f32 %v2107, %v2014
    %v2109 = vmul.f32 %v2107, %v2015
    %v2110 = vmul.f32 %v2107, %v2016
    %v2111 = vmul.f32 %v2107, %v2017
    %2116 = vrot.lane.b32.xlu0 %v2108, 124
    %v2117 = vpop.permute.xlu0 %2116
    %2118 = vrot.lane.b32.xlu0 %v2109, 124
    %v2119 = vpop.permute.xlu0 %2118
    %2120 = vrot.lane.b32.xlu0 %v2110, 124
    %v2121 = vpop.permute.xlu0 %2120
    %2122 = vrot.lane.b32.xlu0 %v2111, 124
    %v2123 = vpop.permute.xlu0 %2122
    %v2128 = vadd.f32 %v2102, %v2117
    %v2129 = vadd.f32 %v2103, %v2119
    %v2130 = vadd.f32 %v2104, %v2121
    %v2131 = vadd.f32 %v2105, %v2123
    %s2132 = sld [smem:[#allocation9 + $0x52]]
    %v2133 = vstv %s2132
    %v2134 = vmul.f32 %v2133, %v2014
    %v2135 = vmul.f32 %v2133, %v2015
    %v2136 = vmul.f32 %v2133, %v2016
    %v2137 = vmul.f32 %v2133, %v2017
    %2142 = vrot.lane.b32.xlu0 %v2134, 123
    %v2143 = vpop.permute.xlu0 %2142
    %2144 = vrot.lane.b32.xlu0 %v2135, 123
    %v2145 = vpop.permute.xlu0 %2144
    %2146 = vrot.lane.b32.xlu0 %v2136, 123
    %v2147 = vpop.permute.xlu0 %2146
    %2148 = vrot.lane.b32.xlu0 %v2137, 123
    %v2149 = vpop.permute.xlu0 %2148
    %v2154 = vadd.f32 %v2128, %v2143
    %v2155 = vadd.f32 %v2129, %v2145
    %v2156 = vadd.f32 %v2130, %v2147
    %v2157 = vadd.f32 %v2131, %v2149
    %s2158 = sld [smem:[#allocation9 + $0x53]]
    %v2159 = vstv %s2158
    %v2160 = vmul.f32 %v2159, %v2014
    %v2161 = vmul.f32 %v2159, %v2015
    %v2162 = vmul.f32 %v2159, %v2016
    %v2163 = vmul.f32 %v2159, %v2017
    %2168 = vrot.lane.b32.xlu0 %v2160, 122
    %v2169 = vpop.permute.xlu0 %2168
    %2170 = vrot.lane.b32.xlu0 %v2161, 122
    %v2171 = vpop.permute.xlu0 %2170
    %2172 = vrot.lane.b32.xlu0 %v2162, 122
    %v2173 = vpop.permute.xlu0 %2172
    %2174 = vrot.lane.b32.xlu0 %v2163, 122
    %v2175 = vpop.permute.xlu0 %2174
    %v2180 = vadd.f32 %v2154, %v2169
    %v2181 = vadd.f32 %v2155, %v2171
    %v2182 = vadd.f32 %v2156, %v2173
    %v2183 = vadd.f32 %v2157, %v2175
    %v2184 = vld [vmem:[#allocation3 + $0x5] sm:$0xff]
    %v2185 = vld [vmem:[#allocation3 + $0xd] sm:$0xff]
    %v2186 = vld [vmem:[#allocation3 + $0x1d] sm:$0xff]
    %v2187 = vld [vmem:[#allocation3 + $0x25] sm:$0xff]
    %s2188 = sld [smem:[#allocation9 + $0x54]]
    %v2189 = vstv %s2188
    %v2190 = vmul.f32 %v2189, %v2184
    %v2191 = vmul.f32 %v2189, %v2185
    %v2192 = vmul.f32 %v2189, %v2186
    %v2193 = vmul.f32 %v2189, %v2187
    %v2194 = vadd.f32 %v2180, %v2190
    %v2195 = vadd.f32 %v2181, %v2191
    %v2196 = vadd.f32 %v2182, %v2192
    %v2197 = vadd.f32 %v2183, %v2193
    %s2198 = sld [smem:[#allocation9 + $0x55]]
    %v2199 = vstv %s2198
    %v2200 = vmul.f32 %v2199, %v2184
    %v2201 = vmul.f32 %v2199, %v2185
    %v2202 = vmul.f32 %v2199, %v2186
    %v2203 = vmul.f32 %v2199, %v2187
    %2208 = vrot.lane.b32.xlu0 %v2200, 127
    %v2209 = vpop.permute.xlu0 %2208
    %2210 = vrot.lane.b32.xlu0 %v2201, 127
    %v2211 = vpop.permute.xlu0 %2210
    %2212 = vrot.lane.b32.xlu0 %v2202, 127
    %v2213 = vpop.permute.xlu0 %2212
    %2214 = vrot.lane.b32.xlu0 %v2203, 127
    %v2215 = vpop.permute.xlu0 %2214
    %v2220 = vadd.f32 %v2194, %v2209
    %v2221 = vadd.f32 %v2195, %v2211
    %v2222 = vadd.f32 %v2196, %v2213
    %v2223 = vadd.f32 %v2197, %v2215
    %s2224 = sld [smem:[#allocation9 + $0x56]]
    %v2225 = vstv %s2224
    %v2226 = vmul.f32 %v2225, %v2184
    %v2227 = vmul.f32 %v2225, %v2185
    %v2228 = vmul.f32 %v2225, %v2186
    %v2229 = vmul.f32 %v2225, %v2187
    %2234 = vrot.lane.b32.xlu0 %v2226, 126
    %v2235 = vpop.permute.xlu0 %2234
    %2236 = vrot.lane.b32.xlu0 %v2227, 126
    %v2237 = vpop.permute.xlu0 %2236
    %2238 = vrot.lane.b32.xlu0 %v2228, 126
    %v2239 = vpop.permute.xlu0 %2238
    %2240 = vrot.lane.b32.xlu0 %v2229, 126
    %v2241 = vpop.permute.xlu0 %2240
    %v2246 = vadd.f32 %v2220, %v2235
    %v2247 = vadd.f32 %v2221, %v2237
    %v2248 = vadd.f32 %v2222, %v2239
    %v2249 = vadd.f32 %v2223, %v2241
    %s2250 = sld [smem:[#allocation9 + $0x57]]
    %v2251 = vstv %s2250
    %v2252 = vmul.f32 %v2251, %v2184
    %v2253 = vmul.f32 %v2251, %v2185
    %v2254 = vmul.f32 %v2251, %v2186
    %v2255 = vmul.f32 %v2251, %v2187
    %2260 = vrot.lane.b32.xlu0 %v2252, 125
    %v2261 = vpop.permute.xlu0 %2260
    %2262 = vrot.lane.b32.xlu0 %v2253, 125
    %v2263 = vpop.permute.xlu0 %2262
    %2264 = vrot.lane.b32.xlu0 %v2254, 125
    %v2265 = vpop.permute.xlu0 %2264
    %2266 = vrot.lane.b32.xlu0 %v2255, 125
    %v2267 = vpop.permute.xlu0 %2266
    %v2272 = vadd.f32 %v2246, %v2261
    %v2273 = vadd.f32 %v2247, %v2263
    %v2274 = vadd.f32 %v2248, %v2265
    %v2275 = vadd.f32 %v2249, %v2267
    %s2276 = sld [smem:[#allocation9 + $0x58]]
    %v2277 = vstv %s2276
    %v2278 = vmul.f32 %v2277, %v2184
    %v2279 = vmul.f32 %v2277, %v2185
    %v2280 = vmul.f32 %v2277, %v2186
    %v2281 = vmul.f32 %v2277, %v2187
    %2286 = vrot.lane.b32.xlu0 %v2278, 124
    %v2287 = vpop.permute.xlu0 %2286
    %2288 = vrot.lane.b32.xlu0 %v2279, 124
    %v2289 = vpop.permute.xlu0 %2288
    %2290 = vrot.lane.b32.xlu0 %v2280, 124
    %v2291 = vpop.permute.xlu0 %2290
    %2292 = vrot.lane.b32.xlu0 %v2281, 124
    %v2293 = vpop.permute.xlu0 %2292
    %v2298 = vadd.f32 %v2272, %v2287
    %v2299 = vadd.f32 %v2273, %v2289
    %v2300 = vadd.f32 %v2274, %v2291
    %v2301 = vadd.f32 %v2275, %v2293
    %s2302 = sld [smem:[#allocation9 + $0x59]]
    %v2303 = vstv %s2302
    %v2304 = vmul.f32 %v2303, %v2184
    %v2305 = vmul.f32 %v2303, %v2185
    %v2306 = vmul.f32 %v2303, %v2186
    %v2307 = vmul.f32 %v2303, %v2187
    %2312 = vrot.lane.b32.xlu0 %v2304, 123
    %v2313 = vpop.permute.xlu0 %2312
    %2314 = vrot.lane.b32.xlu0 %v2305, 123
    %v2315 = vpop.permute.xlu0 %2314
    %2316 = vrot.lane.b32.xlu0 %v2306, 123
    %v2317 = vpop.permute.xlu0 %2316
    %2318 = vrot.lane.b32.xlu0 %v2307, 123
    %v2319 = vpop.permute.xlu0 %2318
    %v2324 = vadd.f32 %v2298, %v2313
    %v2325 = vadd.f32 %v2299, %v2315
    %v2326 = vadd.f32 %v2300, %v2317
    %v2327 = vadd.f32 %v2301, %v2319
    %s2328 = sld [smem:[#allocation9 + $0x5a]]
    %v2329 = vstv %s2328
    %v2330 = vmul.f32 %v2329, %v2184
    %v2331 = vmul.f32 %v2329, %v2185
    %v2332 = vmul.f32 %v2329, %v2186
    %v2333 = vmul.f32 %v2329, %v2187
    %2338 = vrot.lane.b32.xlu0 %v2330, 122
    %v2339 = vpop.permute.xlu0 %2338
    %2340 = vrot.lane.b32.xlu0 %v2331, 122
    %v2341 = vpop.permute.xlu0 %2340
    %2342 = vrot.lane.b32.xlu0 %v2332, 122
    %v2343 = vpop.permute.xlu0 %2342
    %2344 = vrot.lane.b32.xlu0 %v2333, 122
    %v2345 = vpop.permute.xlu0 %2344
    %v2350 = vadd.f32 %v2324, %v2339
    %v2351 = vadd.f32 %v2325, %v2341
    %v2352 = vadd.f32 %v2326, %v2343
    %v2353 = vadd.f32 %v2327, %v2345
    %v2354 = vld [vmem:[#allocation3 + $0x6] sm:$0xff]
    %v2355 = vld [vmem:[#allocation3 + $0xe] sm:$0xff]
    %v2356 = vld [vmem:[#allocation3 + $0x1e] sm:$0xff]
    %v2357 = vld [vmem:[#allocation3 + $0x26] sm:$0xff]
    %s2358 = sld [smem:[#allocation9 + $0x5b]]
    %v2359 = vstv %s2358
    %v2360 = vmul.f32 %v2359, %v2354
    %v2361 = vmul.f32 %v2359, %v2355
    %v2362 = vmul.f32 %v2359, %v2356
    %v2363 = vmul.f32 %v2359, %v2357
    %v2364 = vadd.f32 %v2350, %v2360
    %v2365 = vadd.f32 %v2351, %v2361
    %v2366 = vadd.f32 %v2352, %v2362
    %v2367 = vadd.f32 %v2353, %v2363
    %s2368 = sld [smem:[#allocation9 + $0x5c]]
    %v2369 = vstv %s2368
    %v2370 = vmul.f32 %v2369, %v2354
    %v2371 = vmul.f32 %v2369, %v2355
    %v2372 = vmul.f32 %v2369, %v2356
    %v2373 = vmul.f32 %v2369, %v2357
    %2378 = vrot.lane.b32.xlu0 %v2370, 127
    %v2379 = vpop.permute.xlu0 %2378
    %2380 = vrot.lane.b32.xlu0 %v2371, 127
    %v2381 = vpop.permute.xlu0 %2380
    %2382 = vrot.lane.b32.xlu0 %v2372, 127
    %v2383 = vpop.permute.xlu0 %2382
    %2384 = vrot.lane.b32.xlu0 %v2373, 127
    %v2385 = vpop.permute.xlu0 %2384
    %v2390 = vadd.f32 %v2364, %v2379
    %v2391 = vadd.f32 %v2365, %v2381
    %v2392 = vadd.f32 %v2366, %v2383
    %v2393 = vadd.f32 %v2367, %v2385
    %s2394 = sld [smem:[#allocation9 + $0x5d]]
    %v2395 = vstv %s2394
    %v2396 = vmul.f32 %v2395, %v2354
    %v2397 = vmul.f32 %v2395, %v2355
    %v2398 = vmul.f32 %v2395, %v2356
    %v2399 = vmul.f32 %v2395, %v2357
    %2404 = vrot.lane.b32.xlu0 %v2396, 126
    %v2405 = vpop.permute.xlu0 %2404
    %2406 = vrot.lane.b32.xlu0 %v2397, 126
    %v2407 = vpop.permute.xlu0 %2406
    %2408 = vrot.lane.b32.xlu0 %v2398, 126
    %v2409 = vpop.permute.xlu0 %2408
    %2410 = vrot.lane.b32.xlu0 %v2399, 126
    %v2411 = vpop.permute.xlu0 %2410
    %v2416 = vadd.f32 %v2390, %v2405
    %v2417 = vadd.f32 %v2391, %v2407
    %v2418 = vadd.f32 %v2392, %v2409
    %v2419 = vadd.f32 %v2393, %v2411
    %s2420 = sld [smem:[#allocation9 + $0x5e]]
    %v2421 = vstv %s2420
    %v2422 = vmul.f32 %v2421, %v2354
    %v2423 = vmul.f32 %v2421, %v2355
    %v2424 = vmul.f32 %v2421, %v2356
    %v2425 = vmul.f32 %v2421, %v2357
    %2430 = vrot.lane.b32.xlu0 %v2422, 125
    %v2431 = vpop.permute.xlu0 %2430
    %2432 = vrot.lane.b32.xlu0 %v2423, 125
    %v2433 = vpop.permute.xlu0 %2432
    %2434 = vrot.lane.b32.xlu0 %v2424, 125
    %v2435 = vpop.permute.xlu0 %2434
    %2436 = vrot.lane.b32.xlu0 %v2425, 125
    %v2437 = vpop.permute.xlu0 %2436
    %v2442 = vadd.f32 %v2416, %v2431
    %v2443 = vadd.f32 %v2417, %v2433
    %v2444 = vadd.f32 %v2418, %v2435
    %v2445 = vadd.f32 %v2419, %v2437
    %s2446 = sld [smem:[#allocation9 + $0x5f]]
    %v2447 = vstv %s2446
    %v2448 = vmul.f32 %v2447, %v2354
    %v2449 = vmul.f32 %v2447, %v2355
    %v2450 = vmul.f32 %v2447, %v2356
    %v2451 = vmul.f32 %v2447, %v2357
    %2456 = vrot.lane.b32.xlu0 %v2448, 124
    %v2457 = vpop.permute.xlu0 %2456
    %2458 = vrot.lane.b32.xlu0 %v2449, 124
    %v2459 = vpop.permute.xlu0 %2458
    %2460 = vrot.lane.b32.xlu0 %v2450, 124
    %v2461 = vpop.permute.xlu0 %2460
    %2462 = vrot.lane.b32.xlu0 %v2451, 124
    %v2463 = vpop.permute.xlu0 %2462
    %v2468 = vadd.f32 %v2442, %v2457
    %v2469 = vadd.f32 %v2443, %v2459
    %v2470 = vadd.f32 %v2444, %v2461
    %v2471 = vadd.f32 %v2445, %v2463
    %s2472 = sld [smem:[#allocation9 + $0x60]]
    %v2473 = vstv %s2472
    %v2474 = vmul.f32 %v2473, %v2354
    %v2475 = vmul.f32 %v2473, %v2355
    %v2476 = vmul.f32 %v2473, %v2356
    %v2477 = vmul.f32 %v2473, %v2357
    %2482 = vrot.lane.b32.xlu0 %v2474, 123
    %v2483 = vpop.permute.xlu0 %2482
    %2484 = vrot.lane.b32.xlu0 %v2475, 123
    %v2485 = vpop.permute.xlu0 %2484
    %2486 = vrot.lane.b32.xlu0 %v2476, 123
    %v2487 = vpop.permute.xlu0 %2486
    %2488 = vrot.lane.b32.xlu0 %v2477, 123
    %v2489 = vpop.permute.xlu0 %2488
    %v2494 = vadd.f32 %v2468, %v2483
    %v2495 = vadd.f32 %v2469, %v2485
    %v2496 = vadd.f32 %v2470, %v2487
    %v2497 = vadd.f32 %v2471, %v2489
    %s2498 = sld [smem:[#allocation9 + $0x61]]
    %v2499 = vstv %s2498
    %v2500 = vmul.f32 %v2499, %v2354
    %v2501 = vmul.f32 %v2499, %v2355
    %v2502 = vmul.f32 %v2499, %v2356
    %v2503 = vmul.f32 %v2499, %v2357
    %2508 = vrot.lane.b32.xlu0 %v2500, 122
    %v2509 = vpop.permute.xlu0 %2508
    %2510 = vrot.lane.b32.xlu0 %v2501, 122
    %v2511 = vpop.permute.xlu0 %2510
    %2512 = vrot.lane.b32.xlu0 %v2502, 122
    %v2513 = vpop.permute.xlu0 %2512
    %2514 = vrot.lane.b32.xlu0 %v2503, 122
    %v2515 = vpop.permute.xlu0 %2514
    %v2520 = vadd.f32 %v2494, %v2509
    %v2521 = vadd.f32 %v2495, %v2511
    %v2522 = vadd.f32 %v2496, %v2513
    %v2523 = vadd.f32 %v2497, %v2515
    %s2524 = sld [smem:[#allocation4]]
    %v2525 = vstv %s2524
    %v2526 = vadd.f32 %v2520, %v2525
    %v2527 = vadd.f32 %v2521, %v2525
    %v2528 = vadd.f32 %v2522, %v2525
    %v2529 = vadd.f32 %v2523, %v2525
    %v2530 = vmul.f32 %v45, %v2526
    %v2531 = vmul.f32 %v46, %v2527
    %v2532 = vmul.f32 %v47, %v2526
    %v2533 = vmul.f32 %v48, %v2527
    %v2534 = vmul.f32 %v49, %v2526
    %v2535 = vmul.f32 %v50, %v2527
    %v2536 = vmul.f32 %v51, %v2526
    %v2537 = vmul.f32 %v52, %v2527
    %v2538 = vmul.f32 %v53, %v2528
    %v2539 = vmul.f32 %v54, %v2529
    %v2540 = vmul.f32 %v55, %v2528
    %v2541 = vmul.f32 %v56, %v2529
    %v2542 = vmul.f32 %v57, %v2528
    %v2543 = vmul.f32 %v58, %v2529
    %v2544 = vmul.f32 %v59, %v2528
    %v2545 = vmul.f32 %v60, %v2529
    %vm2546 = vcmask 130048
    %2547 = vst.msk [vmem:[#allocation10] sm:$0xff] %vm2546, %v2530
    %2548 = vst.msk [vmem:[#allocation10 + $0x8] sm:$0xff] %vm2546, %v2531
    %2549 = vst.msk [vmem:[#allocation10 + $0x10] sm:$0xff] %vm2546, %v2532
    %2550 = vst.msk [vmem:[#allocation10 + $0x18] sm:$0xff] %vm2546, %v2533
    %2551 = vst.msk [vmem:[#allocation10 + $0x20] sm:$0xff] %vm2546, %v2534
    %2552 = vst.msk [vmem:[#allocation10 + $0x28] sm:$0xff] %vm2546, %v2535
    %2553 = vst.msk [vmem:[#allocation10 + $0x30] sm:$0xff] %vm2546, %v2536
    %2554 = vst.msk [vmem:[#allocation10 + $0x38] sm:$0xff] %vm2546, %v2537
    %2555 = vst.msk [vmem:[#allocation10 + $0x40] sm:$0xff] %vm2546, %v2538
    %2556 = vst.msk [vmem:[#allocation10 + $0x48] sm:$0xff] %vm2546, %v2539
    %2557 = vst.msk [vmem:[#allocation10 + $0x50] sm:$0xff] %vm2546, %v2540
    %2558 = vst.msk [vmem:[#allocation10 + $0x58] sm:$0xff] %vm2546, %v2541
    %2559 = vst.msk [vmem:[#allocation10 + $0x60] sm:$0xff] %vm2546, %v2542
    %2560 = vst.msk [vmem:[#allocation10 + $0x68] sm:$0xff] %vm2546, %v2543
    %2561 = vst.msk [vmem:[#allocation10 + $0x70] sm:$0xff] %vm2546, %v2544
    %2562 = vst.msk [vmem:[#allocation10 + $0x78] sm:$0xff] %vm2546, %v2545
    // Predicated region
    $region22: #{tpu_custom_call.1} parent=1 // pred_check
      _
    $region23: #{tpu_custom_call.1} parent=1 // pred_check_branch
      %2564 = sbr.rel (0) target = $region25
    $region24: #{tpu_custom_call.1} parent=1 // pred_region
      %2566 = vsyncadd [#allocation7], 0
      %s2567 = sshll.u32 [#allocation10], 4
      %s2568 = int_to_ptr.vmem [resolvable:$true] %s2567
      %s2569 = sshll.u32 %s3, 4
      %s2570 = int_to_ptr.hbm [resolvable:$true] %s2569
      %2575 = dma.vmem_to_hbm [thread:$0]  %s2568, 2048, %s2570, [#allocation7], 128, 128, 8
    $region25: #{tpu_custom_call.1} parent=1 // pred_fallthru
      _
    // Predicated region
    $region26: #{tpu_custom_call.1} parent=1 // pred_check
      _
    $region27: #{tpu_custom_call.1} parent=1 // pred_check_branch
      %2577 = sbr.rel (0) target = $region29
    $region28: #{tpu_custom_call.1} parent=1 // pred_region
      %2579 = dma.done [#allocation7], 2048
    $region29: #{tpu_custom_call.1} parent=1 // pred_fallthru
      _
    %2580 = vsyncpa [#allocation6], 1
    %2581 = vsyncpa [#allocation7], 1
    %2582 = vsyncpa [#allocation8], 1

</llo_original>
